<compile_context>
chip_gen: v7x
topology: tpu7x:2x2x1
jax: 0.10.0
libtpu: 0.0.40
codegen_flags: <defaults>
</compile_context>

<pallas_src>
import jax
import jax.numpy as jnp
from jax import lax
from jax.experimental import pallas as pl
from jax.experimental.pallas import tpu as pltpu

BATCH = 2
C_IN = 1
C_OUT = 4
H = W = 16
K = 5
PAD = 2


def prelayer_kernel(xp_ref, w_ref, b_ref, out_ref):
    """Fused 5x5 conv (C_in=1 -> C_out=4, pad already applied) + bias.

    xp_ref:  (BATCH, H+2*PAD, W+2*PAD)  padded input, VMEM
    w_ref:   (C_OUT*K*K,)               flat OIHW conv weights, SMEM
    b_ref:   (C_OUT,)                   bias, SMEM
    out_ref: (BATCH, C_OUT, H, W)       output, VMEM (NCHW)
    """
    accs = [jnp.zeros((BATCH, H, W), jnp.float32) for _ in range(C_OUT)]
    for ky in range(K):
        # One row-band load per ky tap; (BATCH, H, W+2*PAD) stays in registers.
        band = xp_ref[:, ky:ky + H, :]
        for kx in range(K):
            win = band[:, :, kx:kx + W]                # lane-offset slice
            for c in range(C_OUT):
                w = w_ref[c * K * K + ky * K + kx]     # scalar read from SMEM
                accs[c] = accs[c] + w * win
    for c in range(C_OUT):
        out_ref[:, c, :, :] = accs[c] + b_ref[c]


@jax.jit
def prelayer_forward(x_nchw, weight, bias):
    """x_nchw: (BATCH, 1, H, W); weight: (C_OUT, 1, K, K) OIHW; bias: (C_OUT,)."""
    x = x_nchw.reshape(BATCH, H, W).astype(jnp.float32)
    xp = jnp.pad(x, ((0, 0), (PAD, PAD), (PAD, PAD)))          # zero pad, wrapper-side
    w_flat = weight.reshape(C_OUT * K * K).astype(jnp.float32)
    b = bias.astype(jnp.float32)

    out = pl.pallas_call(
        prelayer_kernel,
        out_shape=jax.ShapeDtypeStruct((BATCH, C_OUT, H, W), jnp.float32),
        in_specs=[
            pl.BlockSpec(memory_space=pltpu.MemorySpace.VMEM),   # padded activation
            pl.BlockSpec(memory_space=pltpu.MemorySpace.SMEM),   # conv weights (scalars)
            pl.BlockSpec(memory_space=pltpu.MemorySpace.SMEM),   # bias (scalars)
        ],
        out_specs=pl.BlockSpec(memory_space=pltpu.MemorySpace.VMEM),
    )(xp, w_flat, b)
    return out


# ---------------- deterministic parameter construction ----------------
def make_dct_weights():
    # Deterministic stand-in for DCT.npy: 4 low-frequency 5x5 2D-DCT-II filters.
    i = jnp.arange(K, dtype=jnp.float32)

    def basis(u):
        scale = jnp.sqrt(1.0 / K) if u == 0 else jnp.sqrt(2.0 / K)
        return scale * jnp.cos(jnp.pi * (i + 0.5) * u / K)

    pairs = [(0, 1), (1, 0), (1, 1), (2, 2)]
    filt = jnp.stack([jnp.outer(basis(u), basis(v)) for u, v in pairs])  # (4,5,5)
    return filt.reshape(C_OUT, C_IN, K, K).astype(jnp.float32)


# ---------------- plain-JAX reference (for correctness check) ----------------
def ref_forward(x_nchw, weight, bias):
    out = lax.conv_general_dilated(
        x_nchw.astype(jnp.float32), weight.astype(jnp.float32),
        window_strides=(1, 1),
        padding=((PAD, PAD), (PAD, PAD)),
        dimension_numbers=('NCHW', 'OIHW', 'NCHW'),
        precision=lax.Precision.HIGHEST)
    return out + bias.reshape(1, C_OUT, 1, 1)


if __name__ == "__main__":
    key = jax.random.PRNGKey(0)
    kx, kb = jax.random.split(key)

    x = jax.random.normal(kx, (BATCH, C_IN, H, W), jnp.float32)   # NCHW input
    weight = make_dct_weights()                                   # (4, 1, 5, 5)
    # The module resets bias to zero, but it stays a learnable parameter; use a
    # small nonzero bias so the bias path is actually exercised by the check.
    bias = 0.1 * jax.random.normal(kb, (C_OUT,), jnp.float32)

    out = prelayer_forward(x, weight, bias)
    jax.block_until_ready(out)

    ref = ref_forward(x, weight, bias)
    assert out.shape == (BATCH, C_OUT, H, W)
    assert jnp.allclose(out, ref, atol=1e-4, rtol=1e-4)

    print("KERNEL_OK")
</pallas_src>

<mosaic_0001>
module attributes {stable_mosaic.version = 11 : i64} {
  func.func @prelayer_kernel(%arg0: memref<2x20x20xf32, #tpu.memory_space<vmem>>, %arg1: memref<100xf32, #tpu.memory_space<smem>>, %arg2: memref<4xf32, #tpu.memory_space<smem>>, %arg3: memref<2x4x16x16xf32, #tpu.memory_space<vmem>>) attributes {dimension_semantics = [], scalar_prefetch = 0 : i64, scratch_operands = 0 : i64, tpu.core_type = #tpu.core_type<tc>} {
    %cst = arith.constant 0.000000e+00 : f32
    %0 = vector.broadcast %cst : f32 to vector<2x16x16xf32>
    %cst_0 = arith.constant 0.000000e+00 : f32
    %1 = vector.broadcast %cst_0 : f32 to vector<2x16x16xf32>
    %cst_1 = arith.constant 0.000000e+00 : f32
    %2 = vector.broadcast %cst_1 : f32 to vector<2x16x16xf32>
    %cst_2 = arith.constant 0.000000e+00 : f32
    %3 = vector.broadcast %cst_2 : f32 to vector<2x16x16xf32>
    %c0 = arith.constant 0 : index
    %c0_3 = arith.constant 0 : index
    %c0_4 = arith.constant 0 : index
    %4 = vector.load %arg0[%c0, %c0_3, %c0_4] : memref<2x20x20xf32, #tpu.memory_space<vmem>>, vector<2x16x20xf32>
    %5 = vector.extract_strided_slice %4 {offsets = [0, 0, 0], sizes = [2, 16, 16], strides = [1, 1, 1]} : vector<2x16x20xf32> to vector<2x16x16xf32>
    %c0_5 = arith.constant 0 : index
    %6 = memref.load %arg1[%c0_5] : memref<100xf32, #tpu.memory_space<smem>>
    %7 = vector.broadcast %6 : f32 to vector<2x16x16xf32>
    %8 = arith.mulf %7, %5 : vector<2x16x16xf32>
    %9 = arith.addf %0, %8 : vector<2x16x16xf32>
    %c25 = arith.constant 25 : index
    %10 = memref.load %arg1[%c25] : memref<100xf32, #tpu.memory_space<smem>>
    %11 = vector.broadcast %10 : f32 to vector<2x16x16xf32>
    %12 = arith.mulf %11, %5 : vector<2x16x16xf32>
    %13 = arith.addf %1, %12 : vector<2x16x16xf32>
    %c50 = arith.constant 50 : index
    %14 = memref.load %arg1[%c50] : memref<100xf32, #tpu.memory_space<smem>>
    %15 = vector.broadcast %14 : f32 to vector<2x16x16xf32>
    %16 = arith.mulf %15, %5 : vector<2x16x16xf32>
    %17 = arith.addf %2, %16 : vector<2x16x16xf32>
    %c75 = arith.constant 75 : index
    %18 = memref.load %arg1[%c75] : memref<100xf32, #tpu.memory_space<smem>>
    %19 = vector.broadcast %18 : f32 to vector<2x16x16xf32>
    %20 = arith.mulf %19, %5 : vector<2x16x16xf32>
    %21 = arith.addf %3, %20 : vector<2x16x16xf32>
    %22 = vector.extract_strided_slice %4 {offsets = [0, 0, 1], sizes = [2, 16, 16], strides = [1, 1, 1]} : vector<2x16x20xf32> to vector<2x16x16xf32>
    %c1 = arith.constant 1 : index
    %23 = memref.load %arg1[%c1] : memref<100xf32, #tpu.memory_space<smem>>
    %24 = vector.broadcast %23 : f32 to vector<2x16x16xf32>
    %25 = arith.mulf %24, %22 : vector<2x16x16xf32>
    %26 = arith.addf %9, %25 : vector<2x16x16xf32>
    %c26 = arith.constant 26 : index
    %27 = memref.load %arg1[%c26] : memref<100xf32, #tpu.memory_space<smem>>
    %28 = vector.broadcast %27 : f32 to vector<2x16x16xf32>
    %29 = arith.mulf %28, %22 : vector<2x16x16xf32>
    %30 = arith.addf %13, %29 : vector<2x16x16xf32>
    %c51 = arith.constant 51 : index
    %31 = memref.load %arg1[%c51] : memref<100xf32, #tpu.memory_space<smem>>
    %32 = vector.broadcast %31 : f32 to vector<2x16x16xf32>
    %33 = arith.mulf %32, %22 : vector<2x16x16xf32>
    %34 = arith.addf %17, %33 : vector<2x16x16xf32>
    %c76 = arith.constant 76 : index
    %35 = memref.load %arg1[%c76] : memref<100xf32, #tpu.memory_space<smem>>
    %36 = vector.broadcast %35 : f32 to vector<2x16x16xf32>
    %37 = arith.mulf %36, %22 : vector<2x16x16xf32>
    %38 = arith.addf %21, %37 : vector<2x16x16xf32>
    %39 = vector.extract_strided_slice %4 {offsets = [0, 0, 2], sizes = [2, 16, 16], strides = [1, 1, 1]} : vector<2x16x20xf32> to vector<2x16x16xf32>
    %c2 = arith.constant 2 : index
    %40 = memref.load %arg1[%c2] : memref<100xf32, #tpu.memory_space<smem>>
    %41 = vector.broadcast %40 : f32 to vector<2x16x16xf32>
    %42 = arith.mulf %41, %39 : vector<2x16x16xf32>
    %43 = arith.addf %26, %42 : vector<2x16x16xf32>
    %c27 = arith.constant 27 : index
    %44 = memref.load %arg1[%c27] : memref<100xf32, #tpu.memory_space<smem>>
    %45 = vector.broadcast %44 : f32 to vector<2x16x16xf32>
    %46 = arith.mulf %45, %39 : vector<2x16x16xf32>
    %47 = arith.addf %30, %46 : vector<2x16x16xf32>
    %c52 = arith.constant 52 : index
    %48 = memref.load %arg1[%c52] : memref<100xf32, #tpu.memory_space<smem>>
    %49 = vector.broadcast %48 : f32 to vector<2x16x16xf32>
    %50 = arith.mulf %49, %39 : vector<2x16x16xf32>
    %51 = arith.addf %34, %50 : vector<2x16x16xf32>
    %c77 = arith.constant 77 : index
    %52 = memref.load %arg1[%c77] : memref<100xf32, #tpu.memory_space<smem>>
    %53 = vector.broadcast %52 : f32 to vector<2x16x16xf32>
    %54 = arith.mulf %53, %39 : vector<2x16x16xf32>
    %55 = arith.addf %38, %54 : vector<2x16x16xf32>
    %56 = vector.extract_strided_slice %4 {offsets = [0, 0, 3], sizes = [2, 16, 16], strides = [1, 1, 1]} : vector<2x16x20xf32> to vector<2x16x16xf32>
    %c3 = arith.constant 3 : index
    %57 = memref.load %arg1[%c3] : memref<100xf32, #tpu.memory_space<smem>>
    %58 = vector.broadcast %57 : f32 to vector<2x16x16xf32>
    %59 = arith.mulf %58, %56 : vector<2x16x16xf32>
    %60 = arith.addf %43, %59 : vector<2x16x16xf32>
    %c28 = arith.constant 28 : index
    %61 = memref.load %arg1[%c28] : memref<100xf32, #tpu.memory_space<smem>>
    %62 = vector.broadcast %61 : f32 to vector<2x16x16xf32>
    %63 = arith.mulf %62, %56 : vector<2x16x16xf32>
    %64 = arith.addf %47, %63 : vector<2x16x16xf32>
    %c53 = arith.constant 53 : index
    %65 = memref.load %arg1[%c53] : memref<100xf32, #tpu.memory_space<smem>>
    %66 = vector.broadcast %65 : f32 to vector<2x16x16xf32>
    %67 = arith.mulf %66, %56 : vector<2x16x16xf32>
    %68 = arith.addf %51, %67 : vector<2x16x16xf32>
    %c78 = arith.constant 78 : index
    %69 = memref.load %arg1[%c78] : memref<100xf32, #tpu.memory_space<smem>>
    %70 = vector.broadcast %69 : f32 to vector<2x16x16xf32>
    %71 = arith.mulf %70, %56 : vector<2x16x16xf32>
    %72 = arith.addf %55, %71 : vector<2x16x16xf32>
    %73 = vector.extract_strided_slice %4 {offsets = [0, 0, 4], sizes = [2, 16, 16], strides = [1, 1, 1]} : vector<2x16x20xf32> to vector<2x16x16xf32>
    %c4 = arith.constant 4 : index
    %74 = memref.load %arg1[%c4] : memref<100xf32, #tpu.memory_space<smem>>
    %75 = vector.broadcast %74 : f32 to vector<2x16x16xf32>
    %76 = arith.mulf %75, %73 : vector<2x16x16xf32>
    %77 = arith.addf %60, %76 : vector<2x16x16xf32>
    %c29 = arith.constant 29 : index
    %78 = memref.load %arg1[%c29] : memref<100xf32, #tpu.memory_space<smem>>
    %79 = vector.broadcast %78 : f32 to vector<2x16x16xf32>
    %80 = arith.mulf %79, %73 : vector<2x16x16xf32>
    %81 = arith.addf %64, %80 : vector<2x16x16xf32>
    %c54 = arith.constant 54 : index
    %82 = memref.load %arg1[%c54] : memref<100xf32, #tpu.memory_space<smem>>
    %83 = vector.broadcast %82 : f32 to vector<2x16x16xf32>
    %84 = arith.mulf %83, %73 : vector<2x16x16xf32>
    %85 = arith.addf %68, %84 : vector<2x16x16xf32>
    %c79 = arith.constant 79 : index
    %86 = memref.load %arg1[%c79] : memref<100xf32, #tpu.memory_space<smem>>
    %87 = vector.broadcast %86 : f32 to vector<2x16x16xf32>
    %88 = arith.mulf %87, %73 : vector<2x16x16xf32>
    %89 = arith.addf %72, %88 : vector<2x16x16xf32>
    %c0_6 = arith.constant 0 : index
    %c1_7 = arith.constant 1 : index
    %c0_8 = arith.constant 0 : index
    %90 = vector.load %arg0[%c0_6, %c1_7, %c0_8] : memref<2x20x20xf32, #tpu.memory_space<vmem>>, vector<2x16x20xf32>
    %91 = vector.extract_strided_slice %90 {offsets = [0, 0, 0], sizes = [2, 16, 16], strides = [1, 1, 1]} : vector<2x16x20xf32> to vector<2x16x16xf32>
    %c5 = arith.constant 5 : index
    %92 = memref.load %arg1[%c5] : memref<100xf32, #tpu.memory_space<smem>>
    %93 = vector.broadcast %92 : f32 to vector<2x16x16xf32>
    %94 = arith.mulf %93, %91 : vector<2x16x16xf32>
    %95 = arith.addf %77, %94 : vector<2x16x16xf32>
    %c30 = arith.constant 30 : index
    %96 = memref.load %arg1[%c30] : memref<100xf32, #tpu.memory_space<smem>>
    %97 = vector.broadcast %96 : f32 to vector<2x16x16xf32>
    %98 = arith.mulf %97, %91 : vector<2x16x16xf32>
    %99 = arith.addf %81, %98 : vector<2x16x16xf32>
    %c55 = arith.constant 55 : index
    %100 = memref.load %arg1[%c55] : memref<100xf32, #tpu.memory_space<smem>>
    %101 = vector.broadcast %100 : f32 to vector<2x16x16xf32>
    %102 = arith.mulf %101, %91 : vector<2x16x16xf32>
    %103 = arith.addf %85, %102 : vector<2x16x16xf32>
    %c80 = arith.constant 80 : index
    %104 = memref.load %arg1[%c80] : memref<100xf32, #tpu.memory_space<smem>>
    %105 = vector.broadcast %104 : f32 to vector<2x16x16xf32>
    %106 = arith.mulf %105, %91 : vector<2x16x16xf32>
    %107 = arith.addf %89, %106 : vector<2x16x16xf32>
    %108 = vector.extract_strided_slice %90 {offsets = [0, 0, 1], sizes = [2, 16, 16], strides = [1, 1, 1]} : vector<2x16x20xf32> to vector<2x16x16xf32>
    %c6 = arith.constant 6 : index
    %109 = memref.load %arg1[%c6] : memref<100xf32, #tpu.memory_space<smem>>
    %110 = vector.broadcast %109 : f32 to vector<2x16x16xf32>
    %111 = arith.mulf %110, %108 : vector<2x16x16xf32>
    %112 = arith.addf %95, %111 : vector<2x16x16xf32>
    %c31 = arith.constant 31 : index
    %113 = memref.load %arg1[%c31] : memref<100xf32, #tpu.memory_space<smem>>
    %114 = vector.broadcast %113 : f32 to vector<2x16x16xf32>
    %115 = arith.mulf %114, %108 : vector<2x16x16xf32>
    %116 = arith.addf %99, %115 : vector<2x16x16xf32>
    %c56 = arith.constant 56 : index
    %117 = memref.load %arg1[%c56] : memref<100xf32, #tpu.memory_space<smem>>
    %118 = vector.broadcast %117 : f32 to vector<2x16x16xf32>
    %119 = arith.mulf %118, %108 : vector<2x16x16xf32>
    %120 = arith.addf %103, %119 : vector<2x16x16xf32>
    %c81 = arith.constant 81 : index
    %121 = memref.load %arg1[%c81] : memref<100xf32, #tpu.memory_space<smem>>
    %122 = vector.broadcast %121 : f32 to vector<2x16x16xf32>
    %123 = arith.mulf %122, %108 : vector<2x16x16xf32>
    %124 = arith.addf %107, %123 : vector<2x16x16xf32>
    %125 = vector.extract_strided_slice %90 {offsets = [0, 0, 2], sizes = [2, 16, 16], strides = [1, 1, 1]} : vector<2x16x20xf32> to vector<2x16x16xf32>
    %c7 = arith.constant 7 : index
    %126 = memref.load %arg1[%c7] : memref<100xf32, #tpu.memory_space<smem>>
    %127 = vector.broadcast %126 : f32 to vector<2x16x16xf32>
    %128 = arith.mulf %127, %125 : vector<2x16x16xf32>
    %129 = arith.addf %112, %128 : vector<2x16x16xf32>
    %c32 = arith.constant 32 : index
    %130 = memref.load %arg1[%c32] : memref<100xf32, #tpu.memory_space<smem>>
    %131 = vector.broadcast %130 : f32 to vector<2x16x16xf32>
    %132 = arith.mulf %131, %125 : vector<2x16x16xf32>
    %133 = arith.addf %116, %132 : vector<2x16x16xf32>
    %c57 = arith.constant 57 : index
    %134 = memref.load %arg1[%c57] : memref<100xf32, #tpu.memory_space<smem>>
    %135 = vector.broadcast %134 : f32 to vector<2x16x16xf32>
    %136 = arith.mulf %135, %125 : vector<2x16x16xf32>
    %137 = arith.addf %120, %136 : vector<2x16x16xf32>
    %c82 = arith.constant 82 : index
    %138 = memref.load %arg1[%c82] : memref<100xf32, #tpu.memory_space<smem>>
    %139 = vector.broadcast %138 : f32 to vector<2x16x16xf32>
    %140 = arith.mulf %139, %125 : vector<2x16x16xf32>
    %141 = arith.addf %124, %140 : vector<2x16x16xf32>
    %142 = vector.extract_strided_slice %90 {offsets = [0, 0, 3], sizes = [2, 16, 16], strides = [1, 1, 1]} : vector<2x16x20xf32> to vector<2x16x16xf32>
    %c8 = arith.constant 8 : index
    %143 = memref.load %arg1[%c8] : memref<100xf32, #tpu.memory_space<smem>>
    %144 = vector.broadcast %143 : f32 to vector<2x16x16xf32>
    %145 = arith.mulf %144, %142 : vector<2x16x16xf32>
    %146 = arith.addf %129, %145 : vector<2x16x16xf32>
    %c33 = arith.constant 33 : index
    %147 = memref.load %arg1[%c33] : memref<100xf32, #tpu.memory_space<smem>>
    %148 = vector.broadcast %147 : f32 to vector<2x16x16xf32>
    %149 = arith.mulf %148, %142 : vector<2x16x16xf32>
    %150 = arith.addf %133, %149 : vector<2x16x16xf32>
    %c58 = arith.constant 58 : index
    %151 = memref.load %arg1[%c58] : memref<100xf32, #tpu.memory_space<smem>>
    %152 = vector.broadcast %151 : f32 to vector<2x16x16xf32>
    %153 = arith.mulf %152, %142 : vector<2x16x16xf32>
    %154 = arith.addf %137, %153 : vector<2x16x16xf32>
    %c83 = arith.constant 83 : index
    %155 = memref.load %arg1[%c83] : memref<100xf32, #tpu.memory_space<smem>>
    %156 = vector.broadcast %155 : f32 to vector<2x16x16xf32>
    %157 = arith.mulf %156, %142 : vector<2x16x16xf32>
    %158 = arith.addf %141, %157 : vector<2x16x16xf32>
    %159 = vector.extract_strided_slice %90 {offsets = [0, 0, 4], sizes = [2, 16, 16], strides = [1, 1, 1]} : vector<2x16x20xf32> to vector<2x16x16xf32>
    %c9 = arith.constant 9 : index
    %160 = memref.load %arg1[%c9] : memref<100xf32, #tpu.memory_space<smem>>
    %161 = vector.broadcast %160 : f32 to vector<2x16x16xf32>
    %162 = arith.mulf %161, %159 : vector<2x16x16xf32>
    %163 = arith.addf %146, %162 : vector<2x16x16xf32>
    %c34 = arith.constant 34 : index
    %164 = memref.load %arg1[%c34] : memref<100xf32, #tpu.memory_space<smem>>
    %165 = vector.broadcast %164 : f32 to vector<2x16x16xf32>
    %166 = arith.mulf %165, %159 : vector<2x16x16xf32>
    %167 = arith.addf %150, %166 : vector<2x16x16xf32>
    %c59 = arith.constant 59 : index
    %168 = memref.load %arg1[%c59] : memref<100xf32, #tpu.memory_space<smem>>
    %169 = vector.broadcast %168 : f32 to vector<2x16x16xf32>
    %170 = arith.mulf %169, %159 : vector<2x16x16xf32>
    %171 = arith.addf %154, %170 : vector<2x16x16xf32>
    %c84 = arith.constant 84 : index
    %172 = memref.load %arg1[%c84] : memref<100xf32, #tpu.memory_space<smem>>
    %173 = vector.broadcast %172 : f32 to vector<2x16x16xf32>
    %174 = arith.mulf %173, %159 : vector<2x16x16xf32>
    %175 = arith.addf %158, %174 : vector<2x16x16xf32>
    %c0_9 = arith.constant 0 : index
    %c2_10 = arith.constant 2 : index
    %c0_11 = arith.constant 0 : index
    %176 = vector.load %arg0[%c0_9, %c2_10, %c0_11] : memref<2x20x20xf32, #tpu.memory_space<vmem>>, vector<2x16x20xf32>
    %177 = vector.extract_strided_slice %176 {offsets = [0, 0, 0], sizes = [2, 16, 16], strides = [1, 1, 1]} : vector<2x16x20xf32> to vector<2x16x16xf32>
    %c10 = arith.constant 10 : index
    %178 = memref.load %arg1[%c10] : memref<100xf32, #tpu.memory_space<smem>>
    %179 = vector.broadcast %178 : f32 to vector<2x16x16xf32>
    %180 = arith.mulf %179, %177 : vector<2x16x16xf32>
    %181 = arith.addf %163, %180 : vector<2x16x16xf32>
    %c35 = arith.constant 35 : index
    %182 = memref.load %arg1[%c35] : memref<100xf32, #tpu.memory_space<smem>>
    %183 = vector.broadcast %182 : f32 to vector<2x16x16xf32>
    %184 = arith.mulf %183, %177 : vector<2x16x16xf32>
    %185 = arith.addf %167, %184 : vector<2x16x16xf32>
    %c60 = arith.constant 60 : index
    %186 = memref.load %arg1[%c60] : memref<100xf32, #tpu.memory_space<smem>>
    %187 = vector.broadcast %186 : f32 to vector<2x16x16xf32>
    %188 = arith.mulf %187, %177 : vector<2x16x16xf32>
    %189 = arith.addf %171, %188 : vector<2x16x16xf32>
    %c85 = arith.constant 85 : index
    %190 = memref.load %arg1[%c85] : memref<100xf32, #tpu.memory_space<smem>>
    %191 = vector.broadcast %190 : f32 to vector<2x16x16xf32>
    %192 = arith.mulf %191, %177 : vector<2x16x16xf32>
    %193 = arith.addf %175, %192 : vector<2x16x16xf32>
    %194 = vector.extract_strided_slice %176 {offsets = [0, 0, 1], sizes = [2, 16, 16], strides = [1, 1, 1]} : vector<2x16x20xf32> to vector<2x16x16xf32>
    %c11 = arith.constant 11 : index
    %195 = memref.load %arg1[%c11] : memref<100xf32, #tpu.memory_space<smem>>
    %196 = vector.broadcast %195 : f32 to vector<2x16x16xf32>
    %197 = arith.mulf %196, %194 : vector<2x16x16xf32>
    %198 = arith.addf %181, %197 : vector<2x16x16xf32>
    %c36 = arith.constant 36 : index
    %199 = memref.load %arg1[%c36] : memref<100xf32, #tpu.memory_space<smem>>
    %200 = vector.broadcast %199 : f32 to vector<2x16x16xf32>
    %201 = arith.mulf %200, %194 : vector<2x16x16xf32>
    %202 = arith.addf %185, %201 : vector<2x16x16xf32>
    %c61 = arith.constant 61 : index
    %203 = memref.load %arg1[%c61] : memref<100xf32, #tpu.memory_space<smem>>
    %204 = vector.broadcast %203 : f32 to vector<2x16x16xf32>
    %205 = arith.mulf %204, %194 : vector<2x16x16xf32>
    %206 = arith.addf %189, %205 : vector<2x16x16xf32>
    %c86 = arith.constant 86 : index
    %207 = memref.load %arg1[%c86] : memref<100xf32, #tpu.memory_space<smem>>
    %208 = vector.broadcast %207 : f32 to vector<2x16x16xf32>
    %209 = arith.mulf %208, %194 : vector<2x16x16xf32>
    %210 = arith.addf %193, %209 : vector<2x16x16xf32>
    %211 = vector.extract_strided_slice %176 {offsets = [0, 0, 2], sizes = [2, 16, 16], strides = [1, 1, 1]} : vector<2x16x20xf32> to vector<2x16x16xf32>
    %c12 = arith.constant 12 : index
    %212 = memref.load %arg1[%c12] : memref<100xf32, #tpu.memory_space<smem>>
    %213 = vector.broadcast %212 : f32 to vector<2x16x16xf32>
    %214 = arith.mulf %213, %211 : vector<2x16x16xf32>
    %215 = arith.addf %198, %214 : vector<2x16x16xf32>
    %c37 = arith.constant 37 : index
    %216 = memref.load %arg1[%c37] : memref<100xf32, #tpu.memory_space<smem>>
    %217 = vector.broadcast %216 : f32 to vector<2x16x16xf32>
    %218 = arith.mulf %217, %211 : vector<2x16x16xf32>
    %219 = arith.addf %202, %218 : vector<2x16x16xf32>
    %c62 = arith.constant 62 : index
    %220 = memref.load %arg1[%c62] : memref<100xf32, #tpu.memory_space<smem>>
    %221 = vector.broadcast %220 : f32 to vector<2x16x16xf32>
    %222 = arith.mulf %221, %211 : vector<2x16x16xf32>
    %223 = arith.addf %206, %222 : vector<2x16x16xf32>
    %c87 = arith.constant 87 : index
    %224 = memref.load %arg1[%c87] : memref<100xf32, #tpu.memory_space<smem>>
    %225 = vector.broadcast %224 : f32 to vector<2x16x16xf32>
    %226 = arith.mulf %225, %211 : vector<2x16x16xf32>
    %227 = arith.addf %210, %226 : vector<2x16x16xf32>
    %228 = vector.extract_strided_slice %176 {offsets = [0, 0, 3], sizes = [2, 16, 16], strides = [1, 1, 1]} : vector<2x16x20xf32> to vector<2x16x16xf32>
    %c13 = arith.constant 13 : index
    %229 = memref.load %arg1[%c13] : memref<100xf32, #tpu.memory_space<smem>>
    %230 = vector.broadcast %229 : f32 to vector<2x16x16xf32>
    %231 = arith.mulf %230, %228 : vector<2x16x16xf32>
    %232 = arith.addf %215, %231 : vector<2x16x16xf32>
    %c38 = arith.constant 38 : index
    %233 = memref.load %arg1[%c38] : memref<100xf32, #tpu.memory_space<smem>>
    %234 = vector.broadcast %233 : f32 to vector<2x16x16xf32>
    %235 = arith.mulf %234, %228 : vector<2x16x16xf32>
    %236 = arith.addf %219, %235 : vector<2x16x16xf32>
    %c63 = arith.constant 63 : index
    %237 = memref.load %arg1[%c63] : memref<100xf32, #tpu.memory_space<smem>>
    %238 = vector.broadcast %237 : f32 to vector<2x16x16xf32>
    %239 = arith.mulf %238, %228 : vector<2x16x16xf32>
    %240 = arith.addf %223, %239 : vector<2x16x16xf32>
    %c88 = arith.constant 88 : index
    %241 = memref.load %arg1[%c88] : memref<100xf32, #tpu.memory_space<smem>>
    %242 = vector.broadcast %241 : f32 to vector<2x16x16xf32>
    %243 = arith.mulf %242, %228 : vector<2x16x16xf32>
    %244 = arith.addf %227, %243 : vector<2x16x16xf32>
    %245 = vector.extract_strided_slice %176 {offsets = [0, 0, 4], sizes = [2, 16, 16], strides = [1, 1, 1]} : vector<2x16x20xf32> to vector<2x16x16xf32>
    %c14 = arith.constant 14 : index
    %246 = memref.load %arg1[%c14] : memref<100xf32, #tpu.memory_space<smem>>
    %247 = vector.broadcast %246 : f32 to vector<2x16x16xf32>
    %248 = arith.mulf %247, %245 : vector<2x16x16xf32>
    %249 = arith.addf %232, %248 : vector<2x16x16xf32>
    %c39 = arith.constant 39 : index
    %250 = memref.load %arg1[%c39] : memref<100xf32, #tpu.memory_space<smem>>
    %251 = vector.broadcast %250 : f32 to vector<2x16x16xf32>
    %252 = arith.mulf %251, %245 : vector<2x16x16xf32>
    %253 = arith.addf %236, %252 : vector<2x16x16xf32>
    %c64 = arith.constant 64 : index
    %254 = memref.load %arg1[%c64] : memref<100xf32, #tpu.memory_space<smem>>
    %255 = vector.broadcast %254 : f32 to vector<2x16x16xf32>
    %256 = arith.mulf %255, %245 : vector<2x16x16xf32>
    %257 = arith.addf %240, %256 : vector<2x16x16xf32>
    %c89 = arith.constant 89 : index
    %258 = memref.load %arg1[%c89] : memref<100xf32, #tpu.memory_space<smem>>
    %259 = vector.broadcast %258 : f32 to vector<2x16x16xf32>
    %260 = arith.mulf %259, %245 : vector<2x16x16xf32>
    %261 = arith.addf %244, %260 : vector<2x16x16xf32>
    %c0_12 = arith.constant 0 : index
    %c3_13 = arith.constant 3 : index
    %c0_14 = arith.constant 0 : index
    %262 = vector.load %arg0[%c0_12, %c3_13, %c0_14] : memref<2x20x20xf32, #tpu.memory_space<vmem>>, vector<2x16x20xf32>
    %263 = vector.extract_strided_slice %262 {offsets = [0, 0, 0], sizes = [2, 16, 16], strides = [1, 1, 1]} : vector<2x16x20xf32> to vector<2x16x16xf32>
    %c15 = arith.constant 15 : index
    %264 = memref.load %arg1[%c15] : memref<100xf32, #tpu.memory_space<smem>>
    %265 = vector.broadcast %264 : f32 to vector<2x16x16xf32>
    %266 = arith.mulf %265, %263 : vector<2x16x16xf32>
    %267 = arith.addf %249, %266 : vector<2x16x16xf32>
    %c40 = arith.constant 40 : index
    %268 = memref.load %arg1[%c40] : memref<100xf32, #tpu.memory_space<smem>>
    %269 = vector.broadcast %268 : f32 to vector<2x16x16xf32>
    %270 = arith.mulf %269, %263 : vector<2x16x16xf32>
    %271 = arith.addf %253, %270 : vector<2x16x16xf32>
    %c65 = arith.constant 65 : index
    %272 = memref.load %arg1[%c65] : memref<100xf32, #tpu.memory_space<smem>>
    %273 = vector.broadcast %272 : f32 to vector<2x16x16xf32>
    %274 = arith.mulf %273, %263 : vector<2x16x16xf32>
    %275 = arith.addf %257, %274 : vector<2x16x16xf32>
    %c90 = arith.constant 90 : index
    %276 = memref.load %arg1[%c90] : memref<100xf32, #tpu.memory_space<smem>>
    %277 = vector.broadcast %276 : f32 to vector<2x16x16xf32>
    %278 = arith.mulf %277, %263 : vector<2x16x16xf32>
    %279 = arith.addf %261, %278 : vector<2x16x16xf32>
    %280 = vector.extract_strided_slice %262 {offsets = [0, 0, 1], sizes = [2, 16, 16], strides = [1, 1, 1]} : vector<2x16x20xf32> to vector<2x16x16xf32>
    %c16 = arith.constant 16 : index
    %281 = memref.load %arg1[%c16] : memref<100xf32, #tpu.memory_space<smem>>
    %282 = vector.broadcast %281 : f32 to vector<2x16x16xf32>
    %283 = arith.mulf %282, %280 : vector<2x16x16xf32>
    %284 = arith.addf %267, %283 : vector<2x16x16xf32>
    %c41 = arith.constant 41 : index
    %285 = memref.load %arg1[%c41] : memref<100xf32, #tpu.memory_space<smem>>
    %286 = vector.broadcast %285 : f32 to vector<2x16x16xf32>
    %287 = arith.mulf %286, %280 : vector<2x16x16xf32>
    %288 = arith.addf %271, %287 : vector<2x16x16xf32>
    %c66 = arith.constant 66 : index
    %289 = memref.load %arg1[%c66] : memref<100xf32, #tpu.memory_space<smem>>
    %290 = vector.broadcast %289 : f32 to vector<2x16x16xf32>
    %291 = arith.mulf %290, %280 : vector<2x16x16xf32>
    %292 = arith.addf %275, %291 : vector<2x16x16xf32>
    %c91 = arith.constant 91 : index
    %293 = memref.load %arg1[%c91] : memref<100xf32, #tpu.memory_space<smem>>
    %294 = vector.broadcast %293 : f32 to vector<2x16x16xf32>
    %295 = arith.mulf %294, %280 : vector<2x16x16xf32>
    %296 = arith.addf %279, %295 : vector<2x16x16xf32>
    %297 = vector.extract_strided_slice %262 {offsets = [0, 0, 2], sizes = [2, 16, 16], strides = [1, 1, 1]} : vector<2x16x20xf32> to vector<2x16x16xf32>
    %c17 = arith.constant 17 : index
    %298 = memref.load %arg1[%c17] : memref<100xf32, #tpu.memory_space<smem>>
    %299 = vector.broadcast %298 : f32 to vector<2x16x16xf32>
    %300 = arith.mulf %299, %297 : vector<2x16x16xf32>
    %301 = arith.addf %284, %300 : vector<2x16x16xf32>
    %c42 = arith.constant 42 : index
    %302 = memref.load %arg1[%c42] : memref<100xf32, #tpu.memory_space<smem>>
    %303 = vector.broadcast %302 : f32 to vector<2x16x16xf32>
    %304 = arith.mulf %303, %297 : vector<2x16x16xf32>
    %305 = arith.addf %288, %304 : vector<2x16x16xf32>
    %c67 = arith.constant 67 : index
    %306 = memref.load %arg1[%c67] : memref<100xf32, #tpu.memory_space<smem>>
    %307 = vector.broadcast %306 : f32 to vector<2x16x16xf32>
    %308 = arith.mulf %307, %297 : vector<2x16x16xf32>
    %309 = arith.addf %292, %308 : vector<2x16x16xf32>
    %c92 = arith.constant 92 : index
    %310 = memref.load %arg1[%c92] : memref<100xf32, #tpu.memory_space<smem>>
    %311 = vector.broadcast %310 : f32 to vector<2x16x16xf32>
    %312 = arith.mulf %311, %297 : vector<2x16x16xf32>
    %313 = arith.addf %296, %312 : vector<2x16x16xf32>
    %314 = vector.extract_strided_slice %262 {offsets = [0, 0, 3], sizes = [2, 16, 16], strides = [1, 1, 1]} : vector<2x16x20xf32> to vector<2x16x16xf32>
    %c18 = arith.constant 18 : index
    %315 = memref.load %arg1[%c18] : memref<100xf32, #tpu.memory_space<smem>>
    %316 = vector.broadcast %315 : f32 to vector<2x16x16xf32>
    %317 = arith.mulf %316, %314 : vector<2x16x16xf32>
    %318 = arith.addf %301, %317 : vector<2x16x16xf32>
    %c43 = arith.constant 43 : index
    %319 = memref.load %arg1[%c43] : memref<100xf32, #tpu.memory_space<smem>>
    %320 = vector.broadcast %319 : f32 to vector<2x16x16xf32>
    %321 = arith.mulf %320, %314 : vector<2x16x16xf32>
    %322 = arith.addf %305, %321 : vector<2x16x16xf32>
    %c68 = arith.constant 68 : index
    %323 = memref.load %arg1[%c68] : memref<100xf32, #tpu.memory_space<smem>>
    %324 = vector.broadcast %323 : f32 to vector<2x16x16xf32>
    %325 = arith.mulf %324, %314 : vector<2x16x16xf32>
    %326 = arith.addf %309, %325 : vector<2x16x16xf32>
    %c93 = arith.constant 93 : index
    %327 = memref.load %arg1[%c93] : memref<100xf32, #tpu.memory_space<smem>>
    %328 = vector.broadcast %327 : f32 to vector<2x16x16xf32>
    %329 = arith.mulf %328, %314 : vector<2x16x16xf32>
    %330 = arith.addf %313, %329 : vector<2x16x16xf32>
    %331 = vector.extract_strided_slice %262 {offsets = [0, 0, 4], sizes = [2, 16, 16], strides = [1, 1, 1]} : vector<2x16x20xf32> to vector<2x16x16xf32>
    %c19 = arith.constant 19 : index
    %332 = memref.load %arg1[%c19] : memref<100xf32, #tpu.memory_space<smem>>
    %333 = vector.broadcast %332 : f32 to vector<2x16x16xf32>
    %334 = arith.mulf %333, %331 : vector<2x16x16xf32>
    %335 = arith.addf %318, %334 : vector<2x16x16xf32>
    %c44 = arith.constant 44 : index
    %336 = memref.load %arg1[%c44] : memref<100xf32, #tpu.memory_space<smem>>
    %337 = vector.broadcast %336 : f32 to vector<2x16x16xf32>
    %338 = arith.mulf %337, %331 : vector<2x16x16xf32>
    %339 = arith.addf %322, %338 : vector<2x16x16xf32>
    %c69 = arith.constant 69 : index
    %340 = memref.load %arg1[%c69] : memref<100xf32, #tpu.memory_space<smem>>
    %341 = vector.broadcast %340 : f32 to vector<2x16x16xf32>
    %342 = arith.mulf %341, %331 : vector<2x16x16xf32>
    %343 = arith.addf %326, %342 : vector<2x16x16xf32>
    %c94 = arith.constant 94 : index
    %344 = memref.load %arg1[%c94] : memref<100xf32, #tpu.memory_space<smem>>
    %345 = vector.broadcast %344 : f32 to vector<2x16x16xf32>
    %346 = arith.mulf %345, %331 : vector<2x16x16xf32>
    %347 = arith.addf %330, %346 : vector<2x16x16xf32>
    %c0_15 = arith.constant 0 : index
    %c4_16 = arith.constant 4 : index
    %c0_17 = arith.constant 0 : index
    %348 = vector.load %arg0[%c0_15, %c4_16, %c0_17] : memref<2x20x20xf32, #tpu.memory_space<vmem>>, vector<2x16x20xf32>
    %349 = vector.extract_strided_slice %348 {offsets = [0, 0, 0], sizes = [2, 16, 16], strides = [1, 1, 1]} : vector<2x16x20xf32> to vector<2x16x16xf32>
    %c20 = arith.constant 20 : index
    %350 = memref.load %arg1[%c20] : memref<100xf32, #tpu.memory_space<smem>>
    %351 = vector.broadcast %350 : f32 to vector<2x16x16xf32>
    %352 = arith.mulf %351, %349 : vector<2x16x16xf32>
    %353 = arith.addf %335, %352 : vector<2x16x16xf32>
    %c45 = arith.constant 45 : index
    %354 = memref.load %arg1[%c45] : memref<100xf32, #tpu.memory_space<smem>>
    %355 = vector.broadcast %354 : f32 to vector<2x16x16xf32>
    %356 = arith.mulf %355, %349 : vector<2x16x16xf32>
    %357 = arith.addf %339, %356 : vector<2x16x16xf32>
    %c70 = arith.constant 70 : index
    %358 = memref.load %arg1[%c70] : memref<100xf32, #tpu.memory_space<smem>>
    %359 = vector.broadcast %358 : f32 to vector<2x16x16xf32>
    %360 = arith.mulf %359, %349 : vector<2x16x16xf32>
    %361 = arith.addf %343, %360 : vector<2x16x16xf32>
    %c95 = arith.constant 95 : index
    %362 = memref.load %arg1[%c95] : memref<100xf32, #tpu.memory_space<smem>>
    %363 = vector.broadcast %362 : f32 to vector<2x16x16xf32>
    %364 = arith.mulf %363, %349 : vector<2x16x16xf32>
    %365 = arith.addf %347, %364 : vector<2x16x16xf32>
    %366 = vector.extract_strided_slice %348 {offsets = [0, 0, 1], sizes = [2, 16, 16], strides = [1, 1, 1]} : vector<2x16x20xf32> to vector<2x16x16xf32>
    %c21 = arith.constant 21 : index
    %367 = memref.load %arg1[%c21] : memref<100xf32, #tpu.memory_space<smem>>
    %368 = vector.broadcast %367 : f32 to vector<2x16x16xf32>
    %369 = arith.mulf %368, %366 : vector<2x16x16xf32>
    %370 = arith.addf %353, %369 : vector<2x16x16xf32>
    %c46 = arith.constant 46 : index
    %371 = memref.load %arg1[%c46] : memref<100xf32, #tpu.memory_space<smem>>
    %372 = vector.broadcast %371 : f32 to vector<2x16x16xf32>
    %373 = arith.mulf %372, %366 : vector<2x16x16xf32>
    %374 = arith.addf %357, %373 : vector<2x16x16xf32>
    %c71 = arith.constant 71 : index
    %375 = memref.load %arg1[%c71] : memref<100xf32, #tpu.memory_space<smem>>
    %376 = vector.broadcast %375 : f32 to vector<2x16x16xf32>
    %377 = arith.mulf %376, %366 : vector<2x16x16xf32>
    %378 = arith.addf %361, %377 : vector<2x16x16xf32>
    %c96 = arith.constant 96 : index
    %379 = memref.load %arg1[%c96] : memref<100xf32, #tpu.memory_space<smem>>
    %380 = vector.broadcast %379 : f32 to vector<2x16x16xf32>
    %381 = arith.mulf %380, %366 : vector<2x16x16xf32>
    %382 = arith.addf %365, %381 : vector<2x16x16xf32>
    %383 = vector.extract_strided_slice %348 {offsets = [0, 0, 2], sizes = [2, 16, 16], strides = [1, 1, 1]} : vector<2x16x20xf32> to vector<2x16x16xf32>
    %c22 = arith.constant 22 : index
    %384 = memref.load %arg1[%c22] : memref<100xf32, #tpu.memory_space<smem>>
    %385 = vector.broadcast %384 : f32 to vector<2x16x16xf32>
    %386 = arith.mulf %385, %383 : vector<2x16x16xf32>
    %387 = arith.addf %370, %386 : vector<2x16x16xf32>
    %c47 = arith.constant 47 : index
    %388 = memref.load %arg1[%c47] : memref<100xf32, #tpu.memory_space<smem>>
    %389 = vector.broadcast %388 : f32 to vector<2x16x16xf32>
    %390 = arith.mulf %389, %383 : vector<2x16x16xf32>
    %391 = arith.addf %374, %390 : vector<2x16x16xf32>
    %c72 = arith.constant 72 : index
    %392 = memref.load %arg1[%c72] : memref<100xf32, #tpu.memory_space<smem>>
    %393 = vector.broadcast %392 : f32 to vector<2x16x16xf32>
    %394 = arith.mulf %393, %383 : vector<2x16x16xf32>
    %395 = arith.addf %378, %394 : vector<2x16x16xf32>
    %c97 = arith.constant 97 : index
    %396 = memref.load %arg1[%c97] : memref<100xf32, #tpu.memory_space<smem>>
    %397 = vector.broadcast %396 : f32 to vector<2x16x16xf32>
    %398 = arith.mulf %397, %383 : vector<2x16x16xf32>
    %399 = arith.addf %382, %398 : vector<2x16x16xf32>
    %400 = vector.extract_strided_slice %348 {offsets = [0, 0, 3], sizes = [2, 16, 16], strides = [1, 1, 1]} : vector<2x16x20xf32> to vector<2x16x16xf32>
    %c23 = arith.constant 23 : index
    %401 = memref.load %arg1[%c23] : memref<100xf32, #tpu.memory_space<smem>>
    %402 = vector.broadcast %401 : f32 to vector<2x16x16xf32>
    %403 = arith.mulf %402, %400 : vector<2x16x16xf32>
    %404 = arith.addf %387, %403 : vector<2x16x16xf32>
    %c48 = arith.constant 48 : index
    %405 = memref.load %arg1[%c48] : memref<100xf32, #tpu.memory_space<smem>>
    %406 = vector.broadcast %405 : f32 to vector<2x16x16xf32>
    %407 = arith.mulf %406, %400 : vector<2x16x16xf32>
    %408 = arith.addf %391, %407 : vector<2x16x16xf32>
    %c73 = arith.constant 73 : index
    %409 = memref.load %arg1[%c73] : memref<100xf32, #tpu.memory_space<smem>>
    %410 = vector.broadcast %409 : f32 to vector<2x16x16xf32>
    %411 = arith.mulf %410, %400 : vector<2x16x16xf32>
    %412 = arith.addf %395, %411 : vector<2x16x16xf32>
    %c98 = arith.constant 98 : index
    %413 = memref.load %arg1[%c98] : memref<100xf32, #tpu.memory_space<smem>>
    %414 = vector.broadcast %413 : f32 to vector<2x16x16xf32>
    %415 = arith.mulf %414, %400 : vector<2x16x16xf32>
    %416 = arith.addf %399, %415 : vector<2x16x16xf32>
    %417 = vector.extract_strided_slice %348 {offsets = [0, 0, 4], sizes = [2, 16, 16], strides = [1, 1, 1]} : vector<2x16x20xf32> to vector<2x16x16xf32>
    %c24 = arith.constant 24 : index
    %418 = memref.load %arg1[%c24] : memref<100xf32, #tpu.memory_space<smem>>
    %419 = vector.broadcast %418 : f32 to vector<2x16x16xf32>
    %420 = arith.mulf %419, %417 : vector<2x16x16xf32>
    %421 = arith.addf %404, %420 : vector<2x16x16xf32>
    %c49 = arith.constant 49 : index
    %422 = memref.load %arg1[%c49] : memref<100xf32, #tpu.memory_space<smem>>
    %423 = vector.broadcast %422 : f32 to vector<2x16x16xf32>
    %424 = arith.mulf %423, %417 : vector<2x16x16xf32>
    %425 = arith.addf %408, %424 : vector<2x16x16xf32>
    %c74 = arith.constant 74 : index
    %426 = memref.load %arg1[%c74] : memref<100xf32, #tpu.memory_space<smem>>
    %427 = vector.broadcast %426 : f32 to vector<2x16x16xf32>
    %428 = arith.mulf %427, %417 : vector<2x16x16xf32>
    %429 = arith.addf %412, %428 : vector<2x16x16xf32>
    %c99 = arith.constant 99 : index
    %430 = memref.load %arg1[%c99] : memref<100xf32, #tpu.memory_space<smem>>
    %431 = vector.broadcast %430 : f32 to vector<2x16x16xf32>
    %432 = arith.mulf %431, %417 : vector<2x16x16xf32>
    %433 = arith.addf %416, %432 : vector<2x16x16xf32>
    %c0_18 = arith.constant 0 : index
    %434 = memref.load %arg2[%c0_18] : memref<4xf32, #tpu.memory_space<smem>>
    %435 = vector.broadcast %434 : f32 to vector<2x16x16xf32>
    %436 = arith.addf %421, %435 : vector<2x16x16xf32>
    %c0_19 = arith.constant 0 : index
    %c0_20 = arith.constant 0 : index
    %c0_21 = arith.constant 0 : index
    %c0_22 = arith.constant 0 : index
    %437 = vector.load %arg3[%c0_19, %c0_20, %c0_21, %c0_22] : memref<2x4x16x16xf32, #tpu.memory_space<vmem>>, vector<2x1x16x16xf32>
    %438 = vector.shape_cast %437 : vector<2x1x16x16xf32> to vector<2x16x16xf32>
    %439 = vector.shape_cast %436 : vector<2x16x16xf32> to vector<2x1x16x16xf32>
    tpu.vector_store %arg3[%c0_19, %c0_20, %c0_21, %c0_22], %439 {strides = array<i32>} : memref<2x4x16x16xf32, #tpu.memory_space<vmem>>, vector<2x1x16x16xf32>,
    %c1_23 = arith.constant 1 : index
    %440 = memref.load %arg2[%c1_23] : memref<4xf32, #tpu.memory_space<smem>>
    %441 = vector.broadcast %440 : f32 to vector<2x16x16xf32>
    %442 = arith.addf %425, %441 : vector<2x16x16xf32>
    %c0_24 = arith.constant 0 : index
    %c1_25 = arith.constant 1 : index
    %c0_26 = arith.constant 0 : index
    %c0_27 = arith.constant 0 : index
    %443 = vector.load %arg3[%c0_24, %c1_25, %c0_26, %c0_27] : memref<2x4x16x16xf32, #tpu.memory_space<vmem>>, vector<2x1x16x16xf32>
    %444 = vector.shape_cast %443 : vector<2x1x16x16xf32> to vector<2x16x16xf32>
    %445 = vector.shape_cast %442 : vector<2x16x16xf32> to vector<2x1x16x16xf32>
    tpu.vector_store %arg3[%c0_24, %c1_25, %c0_26, %c0_27], %445 {strides = array<i32>} : memref<2x4x16x16xf32, #tpu.memory_space<vmem>>, vector<2x1x16x16xf32>,
    %c2_28 = arith.constant 2 : index
    %446 = memref.load %arg2[%c2_28] : memref<4xf32, #tpu.memory_space<smem>>
    %447 = vector.broadcast %446 : f32 to vector<2x16x16xf32>
    %448 = arith.addf %429, %447 : vector<2x16x16xf32>
    %c0_29 = arith.constant 0 : index
    %c2_30 = arith.constant 2 : index
    %c0_31 = arith.constant 0 : index
    %c0_32 = arith.constant 0 : index
    %449 = vector.load %arg3[%c0_29, %c2_30, %c0_31, %c0_32] : memref<2x4x16x16xf32, #tpu.memory_space<vmem>>, vector<2x1x16x16xf32>
    %450 = vector.shape_cast %449 : vector<2x1x16x16xf32> to vector<2x16x16xf32>
    %451 = vector.shape_cast %448 : vector<2x16x16xf32> to vector<2x1x16x16xf32>
    tpu.vector_store %arg3[%c0_29, %c2_30, %c0_31, %c0_32], %451 {strides = array<i32>} : memref<2x4x16x16xf32, #tpu.memory_space<vmem>>, vector<2x1x16x16xf32>,
    %c3_33 = arith.constant 3 : index
    %452 = memref.load %arg2[%c3_33] : memref<4xf32, #tpu.memory_space<smem>>
    %453 = vector.broadcast %452 : f32 to vector<2x16x16xf32>
    %454 = arith.addf %433, %453 : vector<2x16x16xf32>
    %c0_34 = arith.constant 0 : index
    %c3_35 = arith.constant 3 : index
    %c0_36 = arith.constant 0 : index
    %c0_37 = arith.constant 0 : index
    %455 = vector.load %arg3[%c0_34, %c3_35, %c0_36, %c0_37] : memref<2x4x16x16xf32, #tpu.memory_space<vmem>>, vector<2x1x16x16xf32>
    %456 = vector.shape_cast %455 : vector<2x1x16x16xf32> to vector<2x16x16xf32>
    %457 = vector.shape_cast %454 : vector<2x16x16xf32> to vector<2x1x16x16xf32>
    tpu.vector_store %arg3[%c0_34, %c3_35, %c0_36, %c0_37], %457 {strides = array<i32>} : memref<2x4x16x16xf32, #tpu.memory_space<vmem>>, vector<2x1x16x16xf32>,
    return
  }
}

</mosaic_0001>

<llo_original>
// kernel: prelayer_forward.1
$region0: #{prelayer_forward.1}
  #allocation0 [shape = 'u32[]', space=smem, size = 0x4, offset = 0x4, fixed_abs, tag = 'smem constant byte address 0x4 - core index']
  #allocation1 [shape = 'u32[144,128]{1,0:T(1,128)}', space=vmem, size = 0x12000, scoped, tag = 'internal scratch']
  %s0 = inlined_call_operand.vmem [shape: f32[2,20,20], index: 0, kind: input, shape index: {}]
  %s1 = inlined_call_operand.vmem [shape: f32[100], index: 1, kind: input, shape index: {}]
  %s2 = inlined_call_operand.vmem [shape: f32[4], index: 2, kind: input, shape index: {}]
  %s3 = inlined_call_operand.hbm [shape: f32[2,4,16,16], index: 3, kind: output, shape index: {}]
  %s4 = sld [smem:[#allocation0]]
  $region30: #{prelayer_forward.1} parent=0
    _
  %s6 = ssub.s32 1, %s4
  %s7 = scalar_select 0, %s6, %s4
  $region1: #{prelayer_forward.1} parent=0
    #allocation2 [shape = 'u8[512]{0}', space=smem, size = 0x200, scoped, tag = 'input window, operand 1, single buffered']
    #allocation3 [shape = 's32[1]{0}', space=sflag, size = 0x4, scoped, tag = 'scoped memory for prelayer_forward.1']
    #allocation4 [shape = 's32[1]{0}', space=sflag, size = 0x4, scoped, tag = 'scoped memory for prelayer_forward.1']
    #allocation5 [shape = 'u8[512]{0}', space=smem, size = 0x200, scoped, tag = 'input window, operand 2, single buffered']
    #allocation6 [shape = 's32[1]{0}', space=sflag, size = 0x4, scoped, tag = 'scoped memory for prelayer_forward.1']
    #allocation7 [shape = 'u8[65536]{0}', space=vmem, size = 0x10000, scoped, tag = 'output window, operand 0, single buffered']
    %8 = vsyncpa [#allocation4], 0
    %9 = vsyncpa [#allocation6], 0
    %10 = vsyncpa [#allocation3], 0
    // Predicated region
    $region2: #{prelayer_forward.1} parent=1 // pred_check
      _
    $region3: #{prelayer_forward.1} parent=1 // pred_check_branch
      %12 = sbr.rel (0) target = $region5
    $region4: #{prelayer_forward.1} parent=1 // pred_region
      _
    $region5: #{prelayer_forward.1} parent=1 // pred_fallthru
      _
    // Predicated region
    $region6: #{prelayer_forward.1} parent=1 // pred_check
      _
    $region7: #{prelayer_forward.1} parent=1 // pred_check_branch
      %14 = sbr.rel (0) target = $region9
    $region8: #{prelayer_forward.1} parent=1 // pred_region
      %s16 = ssub.s32 16, 16
      %17 = vsyncadd [#allocation4], %s16
      %s19 = sshll.u32 %s1, 4
      %s20 = int_to_ptr.vmem [resolvable:$true] %s19
      %22 = dma.vmem_to_smem %s20, 16, [#allocation2], [#allocation4]
    $region9: #{prelayer_forward.1} parent=1 // pred_fallthru
      _
    // Predicated region
    $region10: #{prelayer_forward.1} parent=1 // pred_check
      _
    $region11: #{prelayer_forward.1} parent=1 // pred_check_branch
      %24 = sbr.rel (0) target = $region13
    $region12: #{prelayer_forward.1} parent=1 // pred_region
      %s26 = ssub.s32 16, 16
      %27 = vsyncadd [#allocation6], %s26
      %s29 = sshll.u32 %s2, 4
      %s30 = int_to_ptr.vmem [resolvable:$true] %s29
      %32 = dma.vmem_to_smem %s30, 16, [#allocation5], [#allocation6]
    $region13: #{prelayer_forward.1} parent=1 // pred_fallthru
      _
    // Predicated region
    $region14: #{prelayer_forward.1} parent=1 // pred_check
      _
    $region15: #{prelayer_forward.1} parent=1 // pred_check_branch
      %34 = sbr.rel (0) target = $region17
    $region16: #{prelayer_forward.1} parent=1 // pred_region
      %35 = dma.done [#allocation4], 16
    $region17: #{prelayer_forward.1} parent=1 // pred_fallthru
      _
    // Predicated region
    $region18: #{prelayer_forward.1} parent=1 // pred_check
      _
    $region19: #{prelayer_forward.1} parent=1 // pred_check_branch
      %37 = sbr.rel (0) target = $region21
    $region20: #{prelayer_forward.1} parent=1 // pred_region
      %38 = dma.done [#allocation6], 16
    $region21: #{prelayer_forward.1} parent=1 // pred_fallthru
      _
    %39 = sfence
    %v40 = vld [vmem:[%s0] sm:$0xff]
    %v41 = vld [vmem:[%s0 + $0x8] sm:$0xff]
    %v42 = vld [vmem:[%s0 + $0x18] sm:$0xff]
    %v43 = vld [vmem:[%s0 + $0x20] sm:$0xff]
    %s44 = sld [smem:[#allocation2]]
    %v45 = vstv %s44
    %v46 = vmul.f32 %v45, %v40
    %v47 = vmul.f32 %v45, %v41
    %v48 = vmul.f32 %v45, %v42
    %v49 = vmul.f32 %v45, %v43
    %v50 = vadd.f32 %v46, 0.0
    %v51 = vadd.f32 %v47, 0.0
    %v52 = vadd.f32 %v48, 0.0
    %v53 = vadd.f32 %v49, 0.0
    %s54 = sld [smem:[#allocation2 + $0x19]]
    %v55 = vstv %s54
    %v56 = vmul.f32 %v55, %v40
    %v57 = vmul.f32 %v55, %v41
    %v58 = vmul.f32 %v55, %v42
    %v59 = vmul.f32 %v55, %v43
    %v60 = vadd.f32 %v56, 0.0
    %v61 = vadd.f32 %v57, 0.0
    %v62 = vadd.f32 %v58, 0.0
    %v63 = vadd.f32 %v59, 0.0
    %s64 = sld [smem:[#allocation2 + $0x32]]
    %v65 = vstv %s64
    %v66 = vmul.f32 %v65, %v40
    %v67 = vmul.f32 %v65, %v41
    %v68 = vmul.f32 %v65, %v42
    %v69 = vmul.f32 %v65, %v43
    %v70 = vadd.f32 %v66, 0.0
    %v71 = vadd.f32 %v67, 0.0
    %v72 = vadd.f32 %v68, 0.0
    %v73 = vadd.f32 %v69, 0.0
    %s74 = sld [smem:[#allocation2 + $0x4b]]
    %v75 = vstv %s74
    %v76 = vmul.f32 %v75, %v40
    %v77 = vmul.f32 %v75, %v41
    %v78 = vmul.f32 %v75, %v42
    %v79 = vmul.f32 %v75, %v43
    %v80 = vadd.f32 %v76, 0.0
    %v81 = vadd.f32 %v77, 0.0
    %v82 = vadd.f32 %v78, 0.0
    %v83 = vadd.f32 %v79, 0.0
    %s84 = sld [smem:[#allocation2 + $0x1]]
    %v85 = vstv %s84
    %v86 = vmul.f32 %v85, %v40
    %v87 = vmul.f32 %v85, %v41
    %v88 = vmul.f32 %v85, %v42
    %v89 = vmul.f32 %v85, %v43
    %94 = vrot.lane.b32.xlu0 %v86, 127
    %v95 = vpop.permute.xlu0 %94
    %96 = vrot.lane.b32.xlu0 %v87, 127
    %v97 = vpop.permute.xlu0 %96
    %98 = vrot.lane.b32.xlu0 %v88, 127
    %v99 = vpop.permute.xlu0 %98
    %100 = vrot.lane.b32.xlu0 %v89, 127
    %v101 = vpop.permute.xlu0 %100
    %v106 = vadd.f32 %v50, %v95
    %v107 = vadd.f32 %v51, %v97
    %v108 = vadd.f32 %v52, %v99
    %v109 = vadd.f32 %v53, %v101
    %s110 = sld [smem:[#allocation2 + $0x1a]]
    %v111 = vstv %s110
    %v112 = vmul.f32 %v111, %v40
    %v113 = vmul.f32 %v111, %v41
    %v114 = vmul.f32 %v111, %v42
    %v115 = vmul.f32 %v111, %v43
    %120 = vrot.lane.b32.xlu0 %v112, 127
    %v121 = vpop.permute.xlu0 %120
    %122 = vrot.lane.b32.xlu0 %v113, 127
    %v123 = vpop.permute.xlu0 %122
    %124 = vrot.lane.b32.xlu0 %v114, 127
    %v125 = vpop.permute.xlu0 %124
    %126 = vrot.lane.b32.xlu0 %v115, 127
    %v127 = vpop.permute.xlu0 %126
    %v132 = vadd.f32 %v60, %v121
    %v133 = vadd.f32 %v61, %v123
    %v134 = vadd.f32 %v62, %v125
    %v135 = vadd.f32 %v63, %v127
    %s136 = sld [smem:[#allocation2 + $0x33]]
    %v137 = vstv %s136
    %v138 = vmul.f32 %v137, %v40
    %v139 = vmul.f32 %v137, %v41
    %v140 = vmul.f32 %v137, %v42
    %v141 = vmul.f32 %v137, %v43
    %146 = vrot.lane.b32.xlu0 %v138, 127
    %v147 = vpop.permute.xlu0 %146
    %148 = vrot.lane.b32.xlu0 %v139, 127
    %v149 = vpop.permute.xlu0 %148
    %150 = vrot.lane.b32.xlu0 %v140, 127
    %v151 = vpop.permute.xlu0 %150
    %152 = vrot.lane.b32.xlu0 %v141, 127
    %v153 = vpop.permute.xlu0 %152
    %v158 = vadd.f32 %v70, %v147
    %v159 = vadd.f32 %v71, %v149
    %v160 = vadd.f32 %v72, %v151
    %v161 = vadd.f32 %v73, %v153
    %s162 = sld [smem:[#allocation2 + $0x4c]]
    %v163 = vstv %s162
    %v164 = vmul.f32 %v163, %v40
    %v165 = vmul.f32 %v163, %v41
    %v166 = vmul.f32 %v163, %v42
    %v167 = vmul.f32 %v163, %v43
    %172 = vrot.lane.b32.xlu0 %v164, 127
    %v173 = vpop.permute.xlu0 %172
    %174 = vrot.lane.b32.xlu0 %v165, 127
    %v175 = vpop.permute.xlu0 %174
    %176 = vrot.lane.b32.xlu0 %v166, 127
    %v177 = vpop.permute.xlu0 %176
    %178 = vrot.lane.b32.xlu0 %v167, 127
    %v179 = vpop.permute.xlu0 %178
    %v184 = vadd.f32 %v80, %v173
    %v185 = vadd.f32 %v81, %v175
    %v186 = vadd.f32 %v82, %v177
    %v187 = vadd.f32 %v83, %v179
    %s188 = sld [smem:[#allocation2 + $0x2]]
    %v189 = vstv %s188
    %v190 = vmul.f32 %v189, %v40
    %v191 = vmul.f32 %v189, %v41
    %v192 = vmul.f32 %v189, %v42
    %v193 = vmul.f32 %v189, %v43
    %198 = vrot.lane.b32.xlu0 %v190, 126
    %v199 = vpop.permute.xlu0 %198
    %200 = vrot.lane.b32.xlu0 %v191, 126
    %v201 = vpop.permute.xlu0 %200
    %202 = vrot.lane.b32.xlu0 %v192, 126
    %v203 = vpop.permute.xlu0 %202
    %204 = vrot.lane.b32.xlu0 %v193, 126
    %v205 = vpop.permute.xlu0 %204
    %v210 = vadd.f32 %v106, %v199
    %v211 = vadd.f32 %v107, %v201
    %v212 = vadd.f32 %v108, %v203
    %v213 = vadd.f32 %v109, %v205
    %s214 = sld [smem:[#allocation2 + $0x1b]]
    %v215 = vstv %s214
    %v216 = vmul.f32 %v215, %v40
    %v217 = vmul.f32 %v215, %v41
    %v218 = vmul.f32 %v215, %v42
    %v219 = vmul.f32 %v215, %v43
    %224 = vrot.lane.b32.xlu0 %v216, 126
    %v225 = vpop.permute.xlu0 %224
    %226 = vrot.lane.b32.xlu0 %v217, 126
    %v227 = vpop.permute.xlu0 %226
    %228 = vrot.lane.b32.xlu0 %v218, 126
    %v229 = vpop.permute.xlu0 %228
    %230 = vrot.lane.b32.xlu0 %v219, 126
    %v231 = vpop.permute.xlu0 %230
    %v236 = vadd.f32 %v132, %v225
    %v237 = vadd.f32 %v133, %v227
    %v238 = vadd.f32 %v134, %v229
    %v239 = vadd.f32 %v135, %v231
    %s240 = sld [smem:[#allocation2 + $0x34]]
    %v241 = vstv %s240
    %v242 = vmul.f32 %v241, %v40
    %v243 = vmul.f32 %v241, %v41
    %v244 = vmul.f32 %v241, %v42
    %v245 = vmul.f32 %v241, %v43
    %250 = vrot.lane.b32.xlu0 %v242, 126
    %v251 = vpop.permute.xlu0 %250
    %252 = vrot.lane.b32.xlu0 %v243, 126
    %v253 = vpop.permute.xlu0 %252
    %254 = vrot.lane.b32.xlu0 %v244, 126
    %v255 = vpop.permute.xlu0 %254
    %256 = vrot.lane.b32.xlu0 %v245, 126
    %v257 = vpop.permute.xlu0 %256
    %v262 = vadd.f32 %v158, %v251
    %v263 = vadd.f32 %v159, %v253
    %v264 = vadd.f32 %v160, %v255
    %v265 = vadd.f32 %v161, %v257
    %s266 = sld [smem:[#allocation2 + $0x4d]]
    %v267 = vstv %s266
    %v268 = vmul.f32 %v267, %v40
    %v269 = vmul.f32 %v267, %v41
    %v270 = vmul.f32 %v267, %v42
    %v271 = vmul.f32 %v267, %v43
    %276 = vrot.lane.b32.xlu0 %v268, 126
    %v277 = vpop.permute.xlu0 %276
    %278 = vrot.lane.b32.xlu0 %v269, 126
    %v279 = vpop.permute.xlu0 %278
    %280 = vrot.lane.b32.xlu0 %v270, 126
    %v281 = vpop.permute.xlu0 %280
    %282 = vrot.lane.b32.xlu0 %v271, 126
    %v283 = vpop.permute.xlu0 %282
    %v288 = vadd.f32 %v184, %v277
    %v289 = vadd.f32 %v185, %v279
    %v290 = vadd.f32 %v186, %v281
    %v291 = vadd.f32 %v187, %v283
    %s292 = sld [smem:[#allocation2 + $0x3]]
    %v293 = vstv %s292
    %v294 = vmul.f32 %v293, %v40
    %v295 = vmul.f32 %v293, %v41
    %v296 = vmul.f32 %v293, %v42
    %v297 = vmul.f32 %v293, %v43
    %302 = vrot.lane.b32.xlu0 %v294, 125
    %v303 = vpop.permute.xlu0 %302
    %304 = vrot.lane.b32.xlu0 %v295, 125
    %v305 = vpop.permute.xlu0 %304
    %306 = vrot.lane.b32.xlu0 %v296, 125
    %v307 = vpop.permute.xlu0 %306
    %308 = vrot.lane.b32.xlu0 %v297, 125
    %v309 = vpop.permute.xlu0 %308
    %v314 = vadd.f32 %v210, %v303
    %v315 = vadd.f32 %v211, %v305
    %v316 = vadd.f32 %v212, %v307
    %v317 = vadd.f32 %v213, %v309
    %s318 = sld [smem:[#allocation2 + $0x1c]]
    %v319 = vstv %s318
    %v320 = vmul.f32 %v319, %v40
    %v321 = vmul.f32 %v319, %v41
    %v322 = vmul.f32 %v319, %v42
    %v323 = vmul.f32 %v319, %v43
    %328 = vrot.lane.b32.xlu0 %v320, 125
    %v329 = vpop.permute.xlu0 %328
    %330 = vrot.lane.b32.xlu0 %v321, 125
    %v331 = vpop.permute.xlu0 %330
    %332 = vrot.lane.b32.xlu0 %v322, 125
    %v333 = vpop.permute.xlu0 %332
    %334 = vrot.lane.b32.xlu0 %v323, 125
    %v335 = vpop.permute.xlu0 %334
    %v340 = vadd.f32 %v236, %v329
    %v341 = vadd.f32 %v237, %v331
    %v342 = vadd.f32 %v238, %v333
    %v343 = vadd.f32 %v239, %v335
    %s344 = sld [smem:[#allocation2 + $0x35]]
    %v345 = vstv %s344
    %v346 = vmul.f32 %v345, %v40
    %v347 = vmul.f32 %v345, %v41
    %v348 = vmul.f32 %v345, %v42
    %v349 = vmul.f32 %v345, %v43
    %354 = vrot.lane.b32.xlu0 %v346, 125
    %v355 = vpop.permute.xlu0 %354
    %356 = vrot.lane.b32.xlu0 %v347, 125
    %v357 = vpop.permute.xlu0 %356
    %358 = vrot.lane.b32.xlu0 %v348, 125
    %v359 = vpop.permute.xlu0 %358
    %360 = vrot.lane.b32.xlu0 %v349, 125
    %v361 = vpop.permute.xlu0 %360
    %v366 = vadd.f32 %v262, %v355
    %v367 = vadd.f32 %v263, %v357
    %v368 = vadd.f32 %v264, %v359
    %v369 = vadd.f32 %v265, %v361
    %s370 = sld [smem:[#allocation2 + $0x4e]]
    %v371 = vstv %s370
    %v372 = vmul.f32 %v371, %v40
    %v373 = vmul.f32 %v371, %v41
    %v374 = vmul.f32 %v371, %v42
    %v375 = vmul.f32 %v371, %v43
    %380 = vrot.lane.b32.xlu0 %v372, 125
    %v381 = vpop.permute.xlu0 %380
    %382 = vrot.lane.b32.xlu0 %v373, 125
    %v383 = vpop.permute.xlu0 %382
    %384 = vrot.lane.b32.xlu0 %v374, 125
    %v385 = vpop.permute.xlu0 %384
    %386 = vrot.lane.b32.xlu0 %v375, 125
    %v387 = vpop.permute.xlu0 %386
    %v392 = vadd.f32 %v288, %v381
    %v393 = vadd.f32 %v289, %v383
    %v394 = vadd.f32 %v290, %v385
    %v395 = vadd.f32 %v291, %v387
    %s396 = sld [smem:[#allocation2 + $0x4]]
    %v397 = vstv %s396
    %v398 = vmul.f32 %v397, %v40
    %v399 = vmul.f32 %v397, %v41
    %v400 = vmul.f32 %v397, %v42
    %v401 = vmul.f32 %v397, %v43
    %406 = vrot.lane.b32.xlu0 %v398, 124
    %v407 = vpop.permute.xlu0 %406
    %408 = vrot.lane.b32.xlu0 %v399, 124
    %v409 = vpop.permute.xlu0 %408
    %410 = vrot.lane.b32.xlu0 %v400, 124
    %v411 = vpop.permute.xlu0 %410
    %412 = vrot.lane.b32.xlu0 %v401, 124
    %v413 = vpop.permute.xlu0 %412
    %v418 = vadd.f32 %v314, %v407
    %v419 = vadd.f32 %v315, %v409
    %v420 = vadd.f32 %v316, %v411
    %v421 = vadd.f32 %v317, %v413
    %s422 = sld [smem:[#allocation2 + $0x1d]]
    %v423 = vstv %s422
    %v424 = vmul.f32 %v423, %v40
    %v425 = vmul.f32 %v423, %v41
    %v426 = vmul.f32 %v423, %v42
    %v427 = vmul.f32 %v423, %v43
    %432 = vrot.lane.b32.xlu0 %v424, 124
    %v433 = vpop.permute.xlu0 %432
    %434 = vrot.lane.b32.xlu0 %v425, 124
    %v435 = vpop.permute.xlu0 %434
    %436 = vrot.lane.b32.xlu0 %v426, 124
    %v437 = vpop.permute.xlu0 %436
    %438 = vrot.lane.b32.xlu0 %v427, 124
    %v439 = vpop.permute.xlu0 %438
    %v444 = vadd.f32 %v340, %v433
    %v445 = vadd.f32 %v341, %v435
    %v446 = vadd.f32 %v342, %v437
    %v447 = vadd.f32 %v343, %v439
    %s448 = sld [smem:[#allocation2 + $0x36]]
    %v449 = vstv %s448
    %v450 = vmul.f32 %v449, %v40
    %v451 = vmul.f32 %v449, %v41
    %v452 = vmul.f32 %v449, %v42
    %v453 = vmul.f32 %v449, %v43
    %458 = vrot.lane.b32.xlu0 %v450, 124
    %v459 = vpop.permute.xlu0 %458
    %460 = vrot.lane.b32.xlu0 %v451, 124
    %v461 = vpop.permute.xlu0 %460
    %462 = vrot.lane.b32.xlu0 %v452, 124
    %v463 = vpop.permute.xlu0 %462
    %464 = vrot.lane.b32.xlu0 %v453, 124
    %v465 = vpop.permute.xlu0 %464
    %v470 = vadd.f32 %v366, %v459
    %v471 = vadd.f32 %v367, %v461
    %v472 = vadd.f32 %v368, %v463
    %v473 = vadd.f32 %v369, %v465
    %s474 = sld [smem:[#allocation2 + $0x4f]]
    %v475 = vstv %s474
    %v476 = vmul.f32 %v475, %v40
    %v477 = vmul.f32 %v475, %v41
    %v478 = vmul.f32 %v475, %v42
    %v479 = vmul.f32 %v475, %v43
    %484 = vrot.lane.b32.xlu0 %v476, 124
    %v485 = vpop.permute.xlu0 %484
    %486 = vrot.lane.b32.xlu0 %v477, 124
    %v487 = vpop.permute.xlu0 %486
    %488 = vrot.lane.b32.xlu0 %v478, 124
    %v489 = vpop.permute.xlu0 %488
    %490 = vrot.lane.b32.xlu0 %v479, 124
    %v491 = vpop.permute.xlu0 %490
    %v496 = vadd.f32 %v392, %v485
    %v497 = vadd.f32 %v393, %v487
    %v498 = vadd.f32 %v394, %v489
    %v499 = vadd.f32 %v395, %v491
    %v500 = vld [vmem:[%s0 + $0x1] sm:$0xff]
    %v501 = vld [vmem:[%s0 + $0x9] sm:$0xff]
    %v502 = vld [vmem:[%s0 + $0x19] sm:$0xff]
    %v503 = vld [vmem:[%s0 + $0x21] sm:$0xff]
    %s504 = sld [smem:[#allocation2 + $0x5]]
    %v505 = vstv %s504
    %v506 = vmul.f32 %v505, %v500
    %v507 = vmul.f32 %v505, %v501
    %v508 = vmul.f32 %v505, %v502
    %v509 = vmul.f32 %v505, %v503
    %v510 = vadd.f32 %v418, %v506
    %v511 = vadd.f32 %v419, %v507
    %v512 = vadd.f32 %v420, %v508
    %v513 = vadd.f32 %v421, %v509
    %s514 = sld [smem:[#allocation2 + $0x1e]]
    %v515 = vstv %s514
    %v516 = vmul.f32 %v515, %v500
    %v517 = vmul.f32 %v515, %v501
    %v518 = vmul.f32 %v515, %v502
    %v519 = vmul.f32 %v515, %v503
    %v520 = vadd.f32 %v444, %v516
    %v521 = vadd.f32 %v445, %v517
    %v522 = vadd.f32 %v446, %v518
    %v523 = vadd.f32 %v447, %v519
    %s524 = sld [smem:[#allocation2 + $0x37]]
    %v525 = vstv %s524
    %v526 = vmul.f32 %v525, %v500
    %v527 = vmul.f32 %v525, %v501
    %v528 = vmul.f32 %v525, %v502
    %v529 = vmul.f32 %v525, %v503
    %v530 = vadd.f32 %v470, %v526
    %v531 = vadd.f32 %v471, %v527
    %v532 = vadd.f32 %v472, %v528
    %v533 = vadd.f32 %v473, %v529
    %s534 = sld [smem:[#allocation2 + $0x50]]
    %v535 = vstv %s534
    %v536 = vmul.f32 %v535, %v500
    %v537 = vmul.f32 %v535, %v501
    %v538 = vmul.f32 %v535, %v502
    %v539 = vmul.f32 %v535, %v503
    %v540 = vadd.f32 %v496, %v536
    %v541 = vadd.f32 %v497, %v537
    %v542 = vadd.f32 %v498, %v538
    %v543 = vadd.f32 %v499, %v539
    %s544 = sld [smem:[#allocation2 + $0x6]]
    %v545 = vstv %s544
    %v546 = vmul.f32 %v545, %v500
    %v547 = vmul.f32 %v545, %v501
    %v548 = vmul.f32 %v545, %v502
    %v549 = vmul.f32 %v545, %v503
    %554 = vrot.lane.b32.xlu0 %v546, 127
    %v555 = vpop.permute.xlu0 %554
    %556 = vrot.lane.b32.xlu0 %v547, 127
    %v557 = vpop.permute.xlu0 %556
    %558 = vrot.lane.b32.xlu0 %v548, 127
    %v559 = vpop.permute.xlu0 %558
    %560 = vrot.lane.b32.xlu0 %v549, 127
    %v561 = vpop.permute.xlu0 %560
    %v566 = vadd.f32 %v510, %v555
    %v567 = vadd.f32 %v511, %v557
    %v568 = vadd.f32 %v512, %v559
    %v569 = vadd.f32 %v513, %v561
    %s570 = sld [smem:[#allocation2 + $0x1f]]
    %v571 = vstv %s570
    %v572 = vmul.f32 %v571, %v500
    %v573 = vmul.f32 %v571, %v501
    %v574 = vmul.f32 %v571, %v502
    %v575 = vmul.f32 %v571, %v503
    %580 = vrot.lane.b32.xlu0 %v572, 127
    %v581 = vpop.permute.xlu0 %580
    %582 = vrot.lane.b32.xlu0 %v573, 127
    %v583 = vpop.permute.xlu0 %582
    %584 = vrot.lane.b32.xlu0 %v574, 127
    %v585 = vpop.permute.xlu0 %584
    %586 = vrot.lane.b32.xlu0 %v575, 127
    %v587 = vpop.permute.xlu0 %586
    %v592 = vadd.f32 %v520, %v581
    %v593 = vadd.f32 %v521, %v583
    %v594 = vadd.f32 %v522, %v585
    %v595 = vadd.f32 %v523, %v587
    %s596 = sld [smem:[#allocation2 + $0x38]]
    %v597 = vstv %s596
    %v598 = vmul.f32 %v597, %v500
    %v599 = vmul.f32 %v597, %v501
    %v600 = vmul.f32 %v597, %v502
    %v601 = vmul.f32 %v597, %v503
    %606 = vrot.lane.b32.xlu0 %v598, 127
    %v607 = vpop.permute.xlu0 %606
    %608 = vrot.lane.b32.xlu0 %v599, 127
    %v609 = vpop.permute.xlu0 %608
    %610 = vrot.lane.b32.xlu0 %v600, 127
    %v611 = vpop.permute.xlu0 %610
    %612 = vrot.lane.b32.xlu0 %v601, 127
    %v613 = vpop.permute.xlu0 %612
    %v618 = vadd.f32 %v530, %v607
    %v619 = vadd.f32 %v531, %v609
    %v620 = vadd.f32 %v532, %v611
    %v621 = vadd.f32 %v533, %v613
    %s622 = sld [smem:[#allocation2 + $0x51]]
    %v623 = vstv %s622
    %v624 = vmul.f32 %v623, %v500
    %v625 = vmul.f32 %v623, %v501
    %v626 = vmul.f32 %v623, %v502
    %v627 = vmul.f32 %v623, %v503
    %632 = vrot.lane.b32.xlu0 %v624, 127
    %v633 = vpop.permute.xlu0 %632
    %634 = vrot.lane.b32.xlu0 %v625, 127
    %v635 = vpop.permute.xlu0 %634
    %636 = vrot.lane.b32.xlu0 %v626, 127
    %v637 = vpop.permute.xlu0 %636
    %638 = vrot.lane.b32.xlu0 %v627, 127
    %v639 = vpop.permute.xlu0 %638
    %v644 = vadd.f32 %v540, %v633
    %v645 = vadd.f32 %v541, %v635
    %v646 = vadd.f32 %v542, %v637
    %v647 = vadd.f32 %v543, %v639
    %s648 = sld [smem:[#allocation2 + $0x7]]
    %v649 = vstv %s648
    %v650 = vmul.f32 %v649, %v500
    %v651 = vmul.f32 %v649, %v501
    %v652 = vmul.f32 %v649, %v502
    %v653 = vmul.f32 %v649, %v503
    %658 = vrot.lane.b32.xlu0 %v650, 126
    %v659 = vpop.permute.xlu0 %658
    %660 = vrot.lane.b32.xlu0 %v651, 126
    %v661 = vpop.permute.xlu0 %660
    %662 = vrot.lane.b32.xlu0 %v652, 126
    %v663 = vpop.permute.xlu0 %662
    %664 = vrot.lane.b32.xlu0 %v653, 126
    %v665 = vpop.permute.xlu0 %664
    %v670 = vadd.f32 %v566, %v659
    %v671 = vadd.f32 %v567, %v661
    %v672 = vadd.f32 %v568, %v663
    %v673 = vadd.f32 %v569, %v665
    %s674 = sld [smem:[#allocation2 + $0x20]]
    %v675 = vstv %s674
    %v676 = vmul.f32 %v675, %v500
    %v677 = vmul.f32 %v675, %v501
    %v678 = vmul.f32 %v675, %v502
    %v679 = vmul.f32 %v675, %v503
    %684 = vrot.lane.b32.xlu0 %v676, 126
    %v685 = vpop.permute.xlu0 %684
    %686 = vrot.lane.b32.xlu0 %v677, 126
    %v687 = vpop.permute.xlu0 %686
    %688 = vrot.lane.b32.xlu0 %v678, 126
    %v689 = vpop.permute.xlu0 %688
    %690 = vrot.lane.b32.xlu0 %v679, 126
    %v691 = vpop.permute.xlu0 %690
    %v696 = vadd.f32 %v592, %v685
    %v697 = vadd.f32 %v593, %v687
    %v698 = vadd.f32 %v594, %v689
    %v699 = vadd.f32 %v595, %v691
    %s700 = sld [smem:[#allocation2 + $0x39]]
    %v701 = vstv %s700
    %v702 = vmul.f32 %v701, %v500
    %v703 = vmul.f32 %v701, %v501
    %v704 = vmul.f32 %v701, %v502
    %v705 = vmul.f32 %v701, %v503
    %710 = vrot.lane.b32.xlu0 %v702, 126
    %v711 = vpop.permute.xlu0 %710
    %712 = vrot.lane.b32.xlu0 %v703, 126
    %v713 = vpop.permute.xlu0 %712
    %714 = vrot.lane.b32.xlu0 %v704, 126
    %v715 = vpop.permute.xlu0 %714
    %716 = vrot.lane.b32.xlu0 %v705, 126
    %v717 = vpop.permute.xlu0 %716
    %v722 = vadd.f32 %v618, %v711
    %v723 = vadd.f32 %v619, %v713
    %v724 = vadd.f32 %v620, %v715
    %v725 = vadd.f32 %v621, %v717
    %s726 = sld [smem:[#allocation2 + $0x52]]
    %v727 = vstv %s726
    %v728 = vmul.f32 %v727, %v500
    %v729 = vmul.f32 %v727, %v501
    %v730 = vmul.f32 %v727, %v502
    %v731 = vmul.f32 %v727, %v503
    %736 = vrot.lane.b32.xlu0 %v728, 126
    %v737 = vpop.permute.xlu0 %736
    %738 = vrot.lane.b32.xlu0 %v729, 126
    %v739 = vpop.permute.xlu0 %738
    %740 = vrot.lane.b32.xlu0 %v730, 126
    %v741 = vpop.permute.xlu0 %740
    %742 = vrot.lane.b32.xlu0 %v731, 126
    %v743 = vpop.permute.xlu0 %742
    %v748 = vadd.f32 %v644, %v737
    %v749 = vadd.f32 %v645, %v739
    %v750 = vadd.f32 %v646, %v741
    %v751 = vadd.f32 %v647, %v743
    %s752 = sld [smem:[#allocation2 + $0x8]]
    %v753 = vstv %s752
    %v754 = vmul.f32 %v753, %v500
    %v755 = vmul.f32 %v753, %v501
    %v756 = vmul.f32 %v753, %v502
    %v757 = vmul.f32 %v753, %v503
    %762 = vrot.lane.b32.xlu0 %v754, 125
    %v763 = vpop.permute.xlu0 %762
    %764 = vrot.lane.b32.xlu0 %v755, 125
    %v765 = vpop.permute.xlu0 %764
    %766 = vrot.lane.b32.xlu0 %v756, 125
    %v767 = vpop.permute.xlu0 %766
    %768 = vrot.lane.b32.xlu0 %v757, 125
    %v769 = vpop.permute.xlu0 %768
    %v774 = vadd.f32 %v670, %v763
    %v775 = vadd.f32 %v671, %v765
    %v776 = vadd.f32 %v672, %v767
    %v777 = vadd.f32 %v673, %v769
    %s778 = sld [smem:[#allocation2 + $0x21]]
    %v779 = vstv %s778
    %v780 = vmul.f32 %v779, %v500
    %v781 = vmul.f32 %v779, %v501
    %v782 = vmul.f32 %v779, %v502
    %v783 = vmul.f32 %v779, %v503
    %788 = vrot.lane.b32.xlu0 %v780, 125
    %v789 = vpop.permute.xlu0 %788
    %790 = vrot.lane.b32.xlu0 %v781, 125
    %v791 = vpop.permute.xlu0 %790
    %792 = vrot.lane.b32.xlu0 %v782, 125
    %v793 = vpop.permute.xlu0 %792
    %794 = vrot.lane.b32.xlu0 %v783, 125
    %v795 = vpop.permute.xlu0 %794
    %v800 = vadd.f32 %v696, %v789
    %v801 = vadd.f32 %v697, %v791
    %v802 = vadd.f32 %v698, %v793
    %v803 = vadd.f32 %v699, %v795
    %s804 = sld [smem:[#allocation2 + $0x3a]]
    %v805 = vstv %s804
    %v806 = vmul.f32 %v805, %v500
    %v807 = vmul.f32 %v805, %v501
    %v808 = vmul.f32 %v805, %v502
    %v809 = vmul.f32 %v805, %v503
    %814 = vrot.lane.b32.xlu0 %v806, 125
    %v815 = vpop.permute.xlu0 %814
    %816 = vrot.lane.b32.xlu0 %v807, 125
    %v817 = vpop.permute.xlu0 %816
    %818 = vrot.lane.b32.xlu0 %v808, 125
    %v819 = vpop.permute.xlu0 %818
    %820 = vrot.lane.b32.xlu0 %v809, 125
    %v821 = vpop.permute.xlu0 %820
    %v826 = vadd.f32 %v722, %v815
    %v827 = vadd.f32 %v723, %v817
    %v828 = vadd.f32 %v724, %v819
    %v829 = vadd.f32 %v725, %v821
    %s830 = sld [smem:[#allocation2 + $0x53]]
    %v831 = vstv %s830
    %v832 = vmul.f32 %v831, %v500
    %v833 = vmul.f32 %v831, %v501
    %v834 = vmul.f32 %v831, %v502
    %v835 = vmul.f32 %v831, %v503
    %840 = vrot.lane.b32.xlu0 %v832, 125
    %v841 = vpop.permute.xlu0 %840
    %842 = vrot.lane.b32.xlu0 %v833, 125
    %v843 = vpop.permute.xlu0 %842
    %844 = vrot.lane.b32.xlu0 %v834, 125
    %v845 = vpop.permute.xlu0 %844
    %846 = vrot.lane.b32.xlu0 %v835, 125
    %v847 = vpop.permute.xlu0 %846
    %v852 = vadd.f32 %v748, %v841
    %v853 = vadd.f32 %v749, %v843
    %v854 = vadd.f32 %v750, %v845
    %v855 = vadd.f32 %v751, %v847
    %s856 = sld [smem:[#allocation2 + $0x9]]
    %v857 = vstv %s856
    %v858 = vmul.f32 %v857, %v500
    %v859 = vmul.f32 %v857, %v501
    %v860 = vmul.f32 %v857, %v502
    %v861 = vmul.f32 %v857, %v503
    %866 = vrot.lane.b32.xlu0 %v858, 124
    %v867 = vpop.permute.xlu0 %866
    %868 = vrot.lane.b32.xlu0 %v859, 124
    %v869 = vpop.permute.xlu0 %868
    %870 = vrot.lane.b32.xlu0 %v860, 124
    %v871 = vpop.permute.xlu0 %870
    %872 = vrot.lane.b32.xlu0 %v861, 124
    %v873 = vpop.permute.xlu0 %872
    %v878 = vadd.f32 %v774, %v867
    %v879 = vadd.f32 %v775, %v869
    %v880 = vadd.f32 %v776, %v871
    %v881 = vadd.f32 %v777, %v873
    %s882 = sld [smem:[#allocation2 + $0x22]]
    %v883 = vstv %s882
    %v884 = vmul.f32 %v883, %v500
    %v885 = vmul.f32 %v883, %v501
    %v886 = vmul.f32 %v883, %v502
    %v887 = vmul.f32 %v883, %v503
    %892 = vrot.lane.b32.xlu0 %v884, 124
    %v893 = vpop.permute.xlu0 %892
    %894 = vrot.lane.b32.xlu0 %v885, 124
    %v895 = vpop.permute.xlu0 %894
    %896 = vrot.lane.b32.xlu0 %v886, 124
    %v897 = vpop.permute.xlu0 %896
    %898 = vrot.lane.b32.xlu0 %v887, 124
    %v899 = vpop.permute.xlu0 %898
    %v904 = vadd.f32 %v800, %v893
    %v905 = vadd.f32 %v801, %v895
    %v906 = vadd.f32 %v802, %v897
    %v907 = vadd.f32 %v803, %v899
    %s908 = sld [smem:[#allocation2 + $0x3b]]
    %v909 = vstv %s908
    %v910 = vmul.f32 %v909, %v500
    %v911 = vmul.f32 %v909, %v501
    %v912 = vmul.f32 %v909, %v502
    %v913 = vmul.f32 %v909, %v503
    %918 = vrot.lane.b32.xlu0 %v910, 124
    %v919 = vpop.permute.xlu0 %918
    %920 = vrot.lane.b32.xlu0 %v911, 124
    %v921 = vpop.permute.xlu0 %920
    %922 = vrot.lane.b32.xlu0 %v912, 124
    %v923 = vpop.permute.xlu0 %922
    %924 = vrot.lane.b32.xlu0 %v913, 124
    %v925 = vpop.permute.xlu0 %924
    %v930 = vadd.f32 %v826, %v919
    %v931 = vadd.f32 %v827, %v921
    %v932 = vadd.f32 %v828, %v923
    %v933 = vadd.f32 %v829, %v925
    %s934 = sld [smem:[#allocation2 + $0x54]]
    %v935 = vstv %s934
    %v936 = vmul.f32 %v935, %v500
    %v937 = vmul.f32 %v935, %v501
    %v938 = vmul.f32 %v935, %v502
    %v939 = vmul.f32 %v935, %v503
    %944 = vrot.lane.b32.xlu0 %v936, 124
    %v945 = vpop.permute.xlu0 %944
    %946 = vrot.lane.b32.xlu0 %v937, 124
    %v947 = vpop.permute.xlu0 %946
    %948 = vrot.lane.b32.xlu0 %v938, 124
    %v949 = vpop.permute.xlu0 %948
    %950 = vrot.lane.b32.xlu0 %v939, 124
    %v951 = vpop.permute.xlu0 %950
    %v956 = vadd.f32 %v852, %v945
    %v957 = vadd.f32 %v853, %v947
    %v958 = vadd.f32 %v854, %v949
    %v959 = vadd.f32 %v855, %v951
    %v960 = vld [vmem:[%s0 + $0x2] sm:$0xff]
    %v961 = vld [vmem:[%s0 + $0xa] sm:$0xff]
    %v962 = vld [vmem:[%s0 + $0x1a] sm:$0xff]
    %v963 = vld [vmem:[%s0 + $0x22] sm:$0xff]
    %s964 = sld [smem:[#allocation2 + $0xa]]
    %v965 = vstv %s964
    %v966 = vmul.f32 %v965, %v960
    %v967 = vmul.f32 %v965, %v961
    %v968 = vmul.f32 %v965, %v962
    %v969 = vmul.f32 %v965, %v963
    %v970 = vadd.f32 %v878, %v966
    %v971 = vadd.f32 %v879, %v967
    %v972 = vadd.f32 %v880, %v968
    %v973 = vadd.f32 %v881, %v969
    %s974 = sld [smem:[#allocation2 + $0x23]]
    %v975 = vstv %s974
    %v976 = vmul.f32 %v975, %v960
    %v977 = vmul.f32 %v975, %v961
    %v978 = vmul.f32 %v975, %v962
    %v979 = vmul.f32 %v975, %v963
    %v980 = vadd.f32 %v904, %v976
    %v981 = vadd.f32 %v905, %v977
    %v982 = vadd.f32 %v906, %v978
    %v983 = vadd.f32 %v907, %v979
    %s984 = sld [smem:[#allocation2 + $0x3c]]
    %v985 = vstv %s984
    %v986 = vmul.f32 %v985, %v960
    %v987 = vmul.f32 %v985, %v961
    %v988 = vmul.f32 %v985, %v962
    %v989 = vmul.f32 %v985, %v963
    %v990 = vadd.f32 %v930, %v986
    %v991 = vadd.f32 %v931, %v987
    %v992 = vadd.f32 %v932, %v988
    %v993 = vadd.f32 %v933, %v989
    %s994 = sld [smem:[#allocation2 + $0x55]]
    %v995 = vstv %s994
    %v996 = vmul.f32 %v995, %v960
    %v997 = vmul.f32 %v995, %v961
    %v998 = vmul.f32 %v995, %v962
    %v999 = vmul.f32 %v995, %v963
    %v1000 = vadd.f32 %v956, %v996
    %v1001 = vadd.f32 %v957, %v997
    %v1002 = vadd.f32 %v958, %v998
    %v1003 = vadd.f32 %v959, %v999
    %s1004 = sld [smem:[#allocation2 + $0xb]]
    %v1005 = vstv %s1004
    %v1006 = vmul.f32 %v1005, %v960
    %v1007 = vmul.f32 %v1005, %v961
    %v1008 = vmul.f32 %v1005, %v962
    %v1009 = vmul.f32 %v1005, %v963
    %1014 = vrot.lane.b32.xlu0 %v1006, 127
    %v1015 = vpop.permute.xlu0 %1014
    %1016 = vrot.lane.b32.xlu0 %v1007, 127
    %v1017 = vpop.permute.xlu0 %1016
    %1018 = vrot.lane.b32.xlu0 %v1008, 127
    %v1019 = vpop.permute.xlu0 %1018
    %1020 = vrot.lane.b32.xlu0 %v1009, 127
    %v1021 = vpop.permute.xlu0 %1020
    %v1026 = vadd.f32 %v970, %v1015
    %v1027 = vadd.f32 %v971, %v1017
    %v1028 = vadd.f32 %v972, %v1019
    %v1029 = vadd.f32 %v973, %v1021
    %s1030 = sld [smem:[#allocation2 + $0x24]]
    %v1031 = vstv %s1030
    %v1032 = vmul.f32 %v1031, %v960
    %v1033 = vmul.f32 %v1031, %v961
    %v1034 = vmul.f32 %v1031, %v962
    %v1035 = vmul.f32 %v1031, %v963
    %1040 = vrot.lane.b32.xlu0 %v1032, 127
    %v1041 = vpop.permute.xlu0 %1040
    %1042 = vrot.lane.b32.xlu0 %v1033, 127
    %v1043 = vpop.permute.xlu0 %1042
    %1044 = vrot.lane.b32.xlu0 %v1034, 127
    %v1045 = vpop.permute.xlu0 %1044
    %1046 = vrot.lane.b32.xlu0 %v1035, 127
    %v1047 = vpop.permute.xlu0 %1046
    %v1052 = vadd.f32 %v980, %v1041
    %v1053 = vadd.f32 %v981, %v1043
    %v1054 = vadd.f32 %v982, %v1045
    %v1055 = vadd.f32 %v983, %v1047
    %s1056 = sld [smem:[#allocation2 + $0x3d]]
    %v1057 = vstv %s1056
    %v1058 = vmul.f32 %v1057, %v960
    %v1059 = vmul.f32 %v1057, %v961
    %v1060 = vmul.f32 %v1057, %v962
    %v1061 = vmul.f32 %v1057, %v963
    %1066 = vrot.lane.b32.xlu0 %v1058, 127
    %v1067 = vpop.permute.xlu0 %1066
    %1068 = vrot.lane.b32.xlu0 %v1059, 127
    %v1069 = vpop.permute.xlu0 %1068
    %1070 = vrot.lane.b32.xlu0 %v1060, 127
    %v1071 = vpop.permute.xlu0 %1070
    %1072 = vrot.lane.b32.xlu0 %v1061, 127
    %v1073 = vpop.permute.xlu0 %1072
    %v1078 = vadd.f32 %v990, %v1067
    %v1079 = vadd.f32 %v991, %v1069
    %v1080 = vadd.f32 %v992, %v1071
    %v1081 = vadd.f32 %v993, %v1073
    %s1082 = sld [smem:[#allocation2 + $0x56]]
    %v1083 = vstv %s1082
    %v1084 = vmul.f32 %v1083, %v960
    %v1085 = vmul.f32 %v1083, %v961
    %v1086 = vmul.f32 %v1083, %v962
    %v1087 = vmul.f32 %v1083, %v963
    %1092 = vrot.lane.b32.xlu0 %v1084, 127
    %v1093 = vpop.permute.xlu0 %1092
    %1094 = vrot.lane.b32.xlu0 %v1085, 127
    %v1095 = vpop.permute.xlu0 %1094
    %1096 = vrot.lane.b32.xlu0 %v1086, 127
    %v1097 = vpop.permute.xlu0 %1096
    %1098 = vrot.lane.b32.xlu0 %v1087, 127
    %v1099 = vpop.permute.xlu0 %1098
    %v1104 = vadd.f32 %v1000, %v1093
    %v1105 = vadd.f32 %v1001, %v1095
    %v1106 = vadd.f32 %v1002, %v1097
    %v1107 = vadd.f32 %v1003, %v1099
    %s1108 = sld [smem:[#allocation2 + $0xc]]
    %v1109 = vstv %s1108
    %v1110 = vmul.f32 %v1109, %v960
    %v1111 = vmul.f32 %v1109, %v961
    %v1112 = vmul.f32 %v1109, %v962
    %v1113 = vmul.f32 %v1109, %v963
    %1118 = vrot.lane.b32.xlu0 %v1110, 126
    %v1119 = vpop.permute.xlu0 %1118
    %1120 = vrot.lane.b32.xlu0 %v1111, 126
    %v1121 = vpop.permute.xlu0 %1120
    %1122 = vrot.lane.b32.xlu0 %v1112, 126
    %v1123 = vpop.permute.xlu0 %1122
    %1124 = vrot.lane.b32.xlu0 %v1113, 126
    %v1125 = vpop.permute.xlu0 %1124
    %v1130 = vadd.f32 %v1026, %v1119
    %v1131 = vadd.f32 %v1027, %v1121
    %v1132 = vadd.f32 %v1028, %v1123
    %v1133 = vadd.f32 %v1029, %v1125
    %s1134 = sld [smem:[#allocation2 + $0x25]]
    %v1135 = vstv %s1134
    %v1136 = vmul.f32 %v1135, %v960
    %v1137 = vmul.f32 %v1135, %v961
    %v1138 = vmul.f32 %v1135, %v962
    %v1139 = vmul.f32 %v1135, %v963
    %1144 = vrot.lane.b32.xlu0 %v1136, 126
    %v1145 = vpop.permute.xlu0 %1144
    %1146 = vrot.lane.b32.xlu0 %v1137, 126
    %v1147 = vpop.permute.xlu0 %1146
    %1148 = vrot.lane.b32.xlu0 %v1138, 126
    %v1149 = vpop.permute.xlu0 %1148
    %1150 = vrot.lane.b32.xlu0 %v1139, 126
    %v1151 = vpop.permute.xlu0 %1150
    %v1156 = vadd.f32 %v1052, %v1145
    %v1157 = vadd.f32 %v1053, %v1147
    %v1158 = vadd.f32 %v1054, %v1149
    %v1159 = vadd.f32 %v1055, %v1151
    %s1160 = sld [smem:[#allocation2 + $0x3e]]
    %v1161 = vstv %s1160
    %v1162 = vmul.f32 %v1161, %v960
    %v1163 = vmul.f32 %v1161, %v961
    %v1164 = vmul.f32 %v1161, %v962
    %v1165 = vmul.f32 %v1161, %v963
    %1170 = vrot.lane.b32.xlu0 %v1162, 126
    %v1171 = vpop.permute.xlu0 %1170
    %1172 = vrot.lane.b32.xlu0 %v1163, 126
    %v1173 = vpop.permute.xlu0 %1172
    %1174 = vrot.lane.b32.xlu0 %v1164, 126
    %v1175 = vpop.permute.xlu0 %1174
    %1176 = vrot.lane.b32.xlu0 %v1165, 126
    %v1177 = vpop.permute.xlu0 %1176
    %v1182 = vadd.f32 %v1078, %v1171
    %v1183 = vadd.f32 %v1079, %v1173
    %v1184 = vadd.f32 %v1080, %v1175
    %v1185 = vadd.f32 %v1081, %v1177
    %s1186 = sld [smem:[#allocation2 + $0x57]]
    %v1187 = vstv %s1186
    %v1188 = vmul.f32 %v1187, %v960
    %v1189 = vmul.f32 %v1187, %v961
    %v1190 = vmul.f32 %v1187, %v962
    %v1191 = vmul.f32 %v1187, %v963
    %1196 = vrot.lane.b32.xlu0 %v1188, 126
    %v1197 = vpop.permute.xlu0 %1196
    %1198 = vrot.lane.b32.xlu0 %v1189, 126
    %v1199 = vpop.permute.xlu0 %1198
    %1200 = vrot.lane.b32.xlu0 %v1190, 126
    %v1201 = vpop.permute.xlu0 %1200
    %1202 = vrot.lane.b32.xlu0 %v1191, 126
    %v1203 = vpop.permute.xlu0 %1202
    %v1208 = vadd.f32 %v1104, %v1197
    %v1209 = vadd.f32 %v1105, %v1199
    %v1210 = vadd.f32 %v1106, %v1201
    %v1211 = vadd.f32 %v1107, %v1203
    %s1212 = sld [smem:[#allocation2 + $0xd]]
    %v1213 = vstv %s1212
    %v1214 = vmul.f32 %v1213, %v960
    %v1215 = vmul.f32 %v1213, %v961
    %v1216 = vmul.f32 %v1213, %v962
    %v1217 = vmul.f32 %v1213, %v963
    %1222 = vrot.lane.b32.xlu0 %v1214, 125
    %v1223 = vpop.permute.xlu0 %1222
    %1224 = vrot.lane.b32.xlu0 %v1215, 125
    %v1225 = vpop.permute.xlu0 %1224
    %1226 = vrot.lane.b32.xlu0 %v1216, 125
    %v1227 = vpop.permute.xlu0 %1226
    %1228 = vrot.lane.b32.xlu0 %v1217, 125
    %v1229 = vpop.permute.xlu0 %1228
    %v1234 = vadd.f32 %v1130, %v1223
    %v1235 = vadd.f32 %v1131, %v1225
    %v1236 = vadd.f32 %v1132, %v1227
    %v1237 = vadd.f32 %v1133, %v1229
    %s1238 = sld [smem:[#allocation2 + $0x26]]
    %v1239 = vstv %s1238
    %v1240 = vmul.f32 %v1239, %v960
    %v1241 = vmul.f32 %v1239, %v961
    %v1242 = vmul.f32 %v1239, %v962
    %v1243 = vmul.f32 %v1239, %v963
    %1248 = vrot.lane.b32.xlu0 %v1240, 125
    %v1249 = vpop.permute.xlu0 %1248
    %1250 = vrot.lane.b32.xlu0 %v1241, 125
    %v1251 = vpop.permute.xlu0 %1250
    %1252 = vrot.lane.b32.xlu0 %v1242, 125
    %v1253 = vpop.permute.xlu0 %1252
    %1254 = vrot.lane.b32.xlu0 %v1243, 125
    %v1255 = vpop.permute.xlu0 %1254
    %v1260 = vadd.f32 %v1156, %v1249
    %v1261 = vadd.f32 %v1157, %v1251
    %v1262 = vadd.f32 %v1158, %v1253
    %v1263 = vadd.f32 %v1159, %v1255
    %s1264 = sld [smem:[#allocation2 + $0x3f]]
    %v1265 = vstv %s1264
    %v1266 = vmul.f32 %v1265, %v960
    %v1267 = vmul.f32 %v1265, %v961
    %v1268 = vmul.f32 %v1265, %v962
    %v1269 = vmul.f32 %v1265, %v963
    %1274 = vrot.lane.b32.xlu0 %v1266, 125
    %v1275 = vpop.permute.xlu0 %1274
    %1276 = vrot.lane.b32.xlu0 %v1267, 125
    %v1277 = vpop.permute.xlu0 %1276
    %1278 = vrot.lane.b32.xlu0 %v1268, 125
    %v1279 = vpop.permute.xlu0 %1278
    %1280 = vrot.lane.b32.xlu0 %v1269, 125
    %v1281 = vpop.permute.xlu0 %1280
    %v1286 = vadd.f32 %v1182, %v1275
    %v1287 = vadd.f32 %v1183, %v1277
    %v1288 = vadd.f32 %v1184, %v1279
    %v1289 = vadd.f32 %v1185, %v1281
    %s1290 = sld [smem:[#allocation2 + $0x58]]
    %v1291 = vstv %s1290
    %v1292 = vmul.f32 %v1291, %v960
    %v1293 = vmul.f32 %v1291, %v961
    %v1294 = vmul.f32 %v1291, %v962
    %v1295 = vmul.f32 %v1291, %v963
    %1300 = vrot.lane.b32.xlu0 %v1292, 125
    %v1301 = vpop.permute.xlu0 %1300
    %1302 = vrot.lane.b32.xlu0 %v1293, 125
    %v1303 = vpop.permute.xlu0 %1302
    %1304 = vrot.lane.b32.xlu0 %v1294, 125
    %v1305 = vpop.permute.xlu0 %1304
    %1306 = vrot.lane.b32.xlu0 %v1295, 125
    %v1307 = vpop.permute.xlu0 %1306
    %v1312 = vadd.f32 %v1208, %v1301
    %v1313 = vadd.f32 %v1209, %v1303
    %v1314 = vadd.f32 %v1210, %v1305
    %v1315 = vadd.f32 %v1211, %v1307
    %s1316 = sld [smem:[#allocation2 + $0xe]]
    %v1317 = vstv %s1316
    %v1318 = vmul.f32 %v1317, %v960
    %v1319 = vmul.f32 %v1317, %v961
    %v1320 = vmul.f32 %v1317, %v962
    %v1321 = vmul.f32 %v1317, %v963
    %1326 = vrot.lane.b32.xlu0 %v1318, 124
    %v1327 = vpop.permute.xlu0 %1326
    %1328 = vrot.lane.b32.xlu0 %v1319, 124
    %v1329 = vpop.permute.xlu0 %1328
    %1330 = vrot.lane.b32.xlu0 %v1320, 124
    %v1331 = vpop.permute.xlu0 %1330
    %1332 = vrot.lane.b32.xlu0 %v1321, 124
    %v1333 = vpop.permute.xlu0 %1332
    %v1338 = vadd.f32 %v1234, %v1327
    %v1339 = vadd.f32 %v1235, %v1329
    %v1340 = vadd.f32 %v1236, %v1331
    %v1341 = vadd.f32 %v1237, %v1333
    %s1342 = sld [smem:[#allocation2 + $0x27]]
    %v1343 = vstv %s1342
    %v1344 = vmul.f32 %v1343, %v960
    %v1345 = vmul.f32 %v1343, %v961
    %v1346 = vmul.f32 %v1343, %v962
    %v1347 = vmul.f32 %v1343, %v963
    %1352 = vrot.lane.b32.xlu0 %v1344, 124
    %v1353 = vpop.permute.xlu0 %1352
    %1354 = vrot.lane.b32.xlu0 %v1345, 124
    %v1355 = vpop.permute.xlu0 %1354
    %1356 = vrot.lane.b32.xlu0 %v1346, 124
    %v1357 = vpop.permute.xlu0 %1356
    %1358 = vrot.lane.b32.xlu0 %v1347, 124
    %v1359 = vpop.permute.xlu0 %1358
    %v1364 = vadd.f32 %v1260, %v1353
    %v1365 = vadd.f32 %v1261, %v1355
    %v1366 = vadd.f32 %v1262, %v1357
    %v1367 = vadd.f32 %v1263, %v1359
    %s1368 = sld [smem:[#allocation2 + $0x40]]
    %v1369 = vstv %s1368
    %v1370 = vmul.f32 %v1369, %v960
    %v1371 = vmul.f32 %v1369, %v961
    %v1372 = vmul.f32 %v1369, %v962
    %v1373 = vmul.f32 %v1369, %v963
    %1378 = vrot.lane.b32.xlu0 %v1370, 124
    %v1379 = vpop.permute.xlu0 %1378
    %1380 = vrot.lane.b32.xlu0 %v1371, 124
    %v1381 = vpop.permute.xlu0 %1380
    %1382 = vrot.lane.b32.xlu0 %v1372, 124
    %v1383 = vpop.permute.xlu0 %1382
    %1384 = vrot.lane.b32.xlu0 %v1373, 124
    %v1385 = vpop.permute.xlu0 %1384
    %v1390 = vadd.f32 %v1286, %v1379
    %v1391 = vadd.f32 %v1287, %v1381
    %v1392 = vadd.f32 %v1288, %v1383
    %v1393 = vadd.f32 %v1289, %v1385
    %s1394 = sld [smem:[#allocation2 + $0x59]]
    %v1395 = vstv %s1394
    %v1396 = vmul.f32 %v1395, %v960
    %v1397 = vmul.f32 %v1395, %v961
    %v1398 = vmul.f32 %v1395, %v962
    %v1399 = vmul.f32 %v1395, %v963
    %1404 = vrot.lane.b32.xlu0 %v1396, 124
    %v1405 = vpop.permute.xlu0 %1404
    %1406 = vrot.lane.b32.xlu0 %v1397, 124
    %v1407 = vpop.permute.xlu0 %1406
    %1408 = vrot.lane.b32.xlu0 %v1398, 124
    %v1409 = vpop.permute.xlu0 %1408
    %1410 = vrot.lane.b32.xlu0 %v1399, 124
    %v1411 = vpop.permute.xlu0 %1410
    %v1416 = vadd.f32 %v1312, %v1405
    %v1417 = vadd.f32 %v1313, %v1407
    %v1418 = vadd.f32 %v1314, %v1409
    %v1419 = vadd.f32 %v1315, %v1411
    %v1420 = vld [vmem:[%s0 + $0x3] sm:$0xff]
    %v1421 = vld [vmem:[%s0 + $0xb] sm:$0xff]
    %v1422 = vld [vmem:[%s0 + $0x1b] sm:$0xff]
    %v1423 = vld [vmem:[%s0 + $0x23] sm:$0xff]
    %s1424 = sld [smem:[#allocation2 + $0xf]]
    %v1425 = vstv %s1424
    %v1426 = vmul.f32 %v1425, %v1420
    %v1427 = vmul.f32 %v1425, %v1421
    %v1428 = vmul.f32 %v1425, %v1422
    %v1429 = vmul.f32 %v1425, %v1423
    %v1430 = vadd.f32 %v1338, %v1426
    %v1431 = vadd.f32 %v1339, %v1427
    %v1432 = vadd.f32 %v1340, %v1428
    %v1433 = vadd.f32 %v1341, %v1429
    %s1434 = sld [smem:[#allocation2 + $0x28]]
    %v1435 = vstv %s1434
    %v1436 = vmul.f32 %v1435, %v1420
    %v1437 = vmul.f32 %v1435, %v1421
    %v1438 = vmul.f32 %v1435, %v1422
    %v1439 = vmul.f32 %v1435, %v1423
    %v1440 = vadd.f32 %v1364, %v1436
    %v1441 = vadd.f32 %v1365, %v1437
    %v1442 = vadd.f32 %v1366, %v1438
    %v1443 = vadd.f32 %v1367, %v1439
    %s1444 = sld [smem:[#allocation2 + $0x41]]
    %v1445 = vstv %s1444
    %v1446 = vmul.f32 %v1445, %v1420
    %v1447 = vmul.f32 %v1445, %v1421
    %v1448 = vmul.f32 %v1445, %v1422
    %v1449 = vmul.f32 %v1445, %v1423
    %v1450 = vadd.f32 %v1390, %v1446
    %v1451 = vadd.f32 %v1391, %v1447
    %v1452 = vadd.f32 %v1392, %v1448
    %v1453 = vadd.f32 %v1393, %v1449
    %s1454 = sld [smem:[#allocation2 + $0x5a]]
    %v1455 = vstv %s1454
    %v1456 = vmul.f32 %v1455, %v1420
    %v1457 = vmul.f32 %v1455, %v1421
    %v1458 = vmul.f32 %v1455, %v1422
    %v1459 = vmul.f32 %v1455, %v1423
    %v1460 = vadd.f32 %v1416, %v1456
    %v1461 = vadd.f32 %v1417, %v1457
    %v1462 = vadd.f32 %v1418, %v1458
    %v1463 = vadd.f32 %v1419, %v1459
    %s1464 = sld [smem:[#allocation2 + $0x10]]
    %v1465 = vstv %s1464
    %v1466 = vmul.f32 %v1465, %v1420
    %v1467 = vmul.f32 %v1465, %v1421
    %v1468 = vmul.f32 %v1465, %v1422
    %v1469 = vmul.f32 %v1465, %v1423
    %1474 = vrot.lane.b32.xlu0 %v1466, 127
    %v1475 = vpop.permute.xlu0 %1474
    %1476 = vrot.lane.b32.xlu0 %v1467, 127
    %v1477 = vpop.permute.xlu0 %1476
    %1478 = vrot.lane.b32.xlu0 %v1468, 127
    %v1479 = vpop.permute.xlu0 %1478
    %1480 = vrot.lane.b32.xlu0 %v1469, 127
    %v1481 = vpop.permute.xlu0 %1480
    %v1486 = vadd.f32 %v1430, %v1475
    %v1487 = vadd.f32 %v1431, %v1477
    %v1488 = vadd.f32 %v1432, %v1479
    %v1489 = vadd.f32 %v1433, %v1481
    %s1490 = sld [smem:[#allocation2 + $0x29]]
    %v1491 = vstv %s1490
    %v1492 = vmul.f32 %v1491, %v1420
    %v1493 = vmul.f32 %v1491, %v1421
    %v1494 = vmul.f32 %v1491, %v1422
    %v1495 = vmul.f32 %v1491, %v1423
    %1500 = vrot.lane.b32.xlu0 %v1492, 127
    %v1501 = vpop.permute.xlu0 %1500
    %1502 = vrot.lane.b32.xlu0 %v1493, 127
    %v1503 = vpop.permute.xlu0 %1502
    %1504 = vrot.lane.b32.xlu0 %v1494, 127
    %v1505 = vpop.permute.xlu0 %1504
    %1506 = vrot.lane.b32.xlu0 %v1495, 127
    %v1507 = vpop.permute.xlu0 %1506
    %v1512 = vadd.f32 %v1440, %v1501
    %v1513 = vadd.f32 %v1441, %v1503
    %v1514 = vadd.f32 %v1442, %v1505
    %v1515 = vadd.f32 %v1443, %v1507
    %s1516 = sld [smem:[#allocation2 + $0x42]]
    %v1517 = vstv %s1516
    %v1518 = vmul.f32 %v1517, %v1420
    %v1519 = vmul.f32 %v1517, %v1421
    %v1520 = vmul.f32 %v1517, %v1422
    %v1521 = vmul.f32 %v1517, %v1423
    %1526 = vrot.lane.b32.xlu0 %v1518, 127
    %v1527 = vpop.permute.xlu0 %1526
    %1528 = vrot.lane.b32.xlu0 %v1519, 127
    %v1529 = vpop.permute.xlu0 %1528
    %1530 = vrot.lane.b32.xlu0 %v1520, 127
    %v1531 = vpop.permute.xlu0 %1530
    %1532 = vrot.lane.b32.xlu0 %v1521, 127
    %v1533 = vpop.permute.xlu0 %1532
    %v1538 = vadd.f32 %v1450, %v1527
    %v1539 = vadd.f32 %v1451, %v1529
    %v1540 = vadd.f32 %v1452, %v1531
    %v1541 = vadd.f32 %v1453, %v1533
    %s1542 = sld [smem:[#allocation2 + $0x5b]]
    %v1543 = vstv %s1542
    %v1544 = vmul.f32 %v1543, %v1420
    %v1545 = vmul.f32 %v1543, %v1421
    %v1546 = vmul.f32 %v1543, %v1422
    %v1547 = vmul.f32 %v1543, %v1423
    %1552 = vrot.lane.b32.xlu0 %v1544, 127
    %v1553 = vpop.permute.xlu0 %1552
    %1554 = vrot.lane.b32.xlu0 %v1545, 127
    %v1555 = vpop.permute.xlu0 %1554
    %1556 = vrot.lane.b32.xlu0 %v1546, 127
    %v1557 = vpop.permute.xlu0 %1556
    %1558 = vrot.lane.b32.xlu0 %v1547, 127
    %v1559 = vpop.permute.xlu0 %1558
    %v1564 = vadd.f32 %v1460, %v1553
    %v1565 = vadd.f32 %v1461, %v1555
    %v1566 = vadd.f32 %v1462, %v1557
    %v1567 = vadd.f32 %v1463, %v1559
    %s1568 = sld [smem:[#allocation2 + $0x11]]
    %v1569 = vstv %s1568
    %v1570 = vmul.f32 %v1569, %v1420
    %v1571 = vmul.f32 %v1569, %v1421
    %v1572 = vmul.f32 %v1569, %v1422
    %v1573 = vmul.f32 %v1569, %v1423
    %1578 = vrot.lane.b32.xlu0 %v1570, 126
    %v1579 = vpop.permute.xlu0 %1578
    %1580 = vrot.lane.b32.xlu0 %v1571, 126
    %v1581 = vpop.permute.xlu0 %1580
    %1582 = vrot.lane.b32.xlu0 %v1572, 126
    %v1583 = vpop.permute.xlu0 %1582
    %1584 = vrot.lane.b32.xlu0 %v1573, 126
    %v1585 = vpop.permute.xlu0 %1584
    %v1590 = vadd.f32 %v1486, %v1579
    %v1591 = vadd.f32 %v1487, %v1581
    %v1592 = vadd.f32 %v1488, %v1583
    %v1593 = vadd.f32 %v1489, %v1585
    %s1594 = sld [smem:[#allocation2 + $0x2a]]
    %v1595 = vstv %s1594
    %v1596 = vmul.f32 %v1595, %v1420
    %v1597 = vmul.f32 %v1595, %v1421
    %v1598 = vmul.f32 %v1595, %v1422
    %v1599 = vmul.f32 %v1595, %v1423
    %1604 = vrot.lane.b32.xlu0 %v1596, 126
    %v1605 = vpop.permute.xlu0 %1604
    %1606 = vrot.lane.b32.xlu0 %v1597, 126
    %v1607 = vpop.permute.xlu0 %1606
    %1608 = vrot.lane.b32.xlu0 %v1598, 126
    %v1609 = vpop.permute.xlu0 %1608
    %1610 = vrot.lane.b32.xlu0 %v1599, 126
    %v1611 = vpop.permute.xlu0 %1610
    %v1616 = vadd.f32 %v1512, %v1605
    %v1617 = vadd.f32 %v1513, %v1607
    %v1618 = vadd.f32 %v1514, %v1609
    %v1619 = vadd.f32 %v1515, %v1611
    %s1620 = sld [smem:[#allocation2 + $0x43]]
    %v1621 = vstv %s1620
    %v1622 = vmul.f32 %v1621, %v1420
    %v1623 = vmul.f32 %v1621, %v1421
    %v1624 = vmul.f32 %v1621, %v1422
    %v1625 = vmul.f32 %v1621, %v1423
    %1630 = vrot.lane.b32.xlu0 %v1622, 126
    %v1631 = vpop.permute.xlu0 %1630
    %1632 = vrot.lane.b32.xlu0 %v1623, 126
    %v1633 = vpop.permute.xlu0 %1632
    %1634 = vrot.lane.b32.xlu0 %v1624, 126
    %v1635 = vpop.permute.xlu0 %1634
    %1636 = vrot.lane.b32.xlu0 %v1625, 126
    %v1637 = vpop.permute.xlu0 %1636
    %v1642 = vadd.f32 %v1538, %v1631
    %v1643 = vadd.f32 %v1539, %v1633
    %v1644 = vadd.f32 %v1540, %v1635
    %v1645 = vadd.f32 %v1541, %v1637
    %s1646 = sld [smem:[#allocation2 + $0x5c]]
    %v1647 = vstv %s1646
    %v1648 = vmul.f32 %v1647, %v1420
    %v1649 = vmul.f32 %v1647, %v1421
    %v1650 = vmul.f32 %v1647, %v1422
    %v1651 = vmul.f32 %v1647, %v1423
    %1656 = vrot.lane.b32.xlu0 %v1648, 126
    %v1657 = vpop.permute.xlu0 %1656
    %1658 = vrot.lane.b32.xlu0 %v1649, 126
    %v1659 = vpop.permute.xlu0 %1658
    %1660 = vrot.lane.b32.xlu0 %v1650, 126
    %v1661 = vpop.permute.xlu0 %1660
    %1662 = vrot.lane.b32.xlu0 %v1651, 126
    %v1663 = vpop.permute.xlu0 %1662
    %v1668 = vadd.f32 %v1564, %v1657
    %v1669 = vadd.f32 %v1565, %v1659
    %v1670 = vadd.f32 %v1566, %v1661
    %v1671 = vadd.f32 %v1567, %v1663
    %s1672 = sld [smem:[#allocation2 + $0x12]]
    %v1673 = vstv %s1672
    %v1674 = vmul.f32 %v1673, %v1420
    %v1675 = vmul.f32 %v1673, %v1421
    %v1676 = vmul.f32 %v1673, %v1422
    %v1677 = vmul.f32 %v1673, %v1423
    %1682 = vrot.lane.b32.xlu0 %v1674, 125
    %v1683 = vpop.permute.xlu0 %1682
    %1684 = vrot.lane.b32.xlu0 %v1675, 125
    %v1685 = vpop.permute.xlu0 %1684
    %1686 = vrot.lane.b32.xlu0 %v1676, 125
    %v1687 = vpop.permute.xlu0 %1686
    %1688 = vrot.lane.b32.xlu0 %v1677, 125
    %v1689 = vpop.permute.xlu0 %1688
    %v1694 = vadd.f32 %v1590, %v1683
    %v1695 = vadd.f32 %v1591, %v1685
    %v1696 = vadd.f32 %v1592, %v1687
    %v1697 = vadd.f32 %v1593, %v1689
    %s1698 = sld [smem:[#allocation2 + $0x2b]]
    %v1699 = vstv %s1698
    %v1700 = vmul.f32 %v1699, %v1420
    %v1701 = vmul.f32 %v1699, %v1421
    %v1702 = vmul.f32 %v1699, %v1422
    %v1703 = vmul.f32 %v1699, %v1423
    %1708 = vrot.lane.b32.xlu0 %v1700, 125
    %v1709 = vpop.permute.xlu0 %1708
    %1710 = vrot.lane.b32.xlu0 %v1701, 125
    %v1711 = vpop.permute.xlu0 %1710
    %1712 = vrot.lane.b32.xlu0 %v1702, 125
    %v1713 = vpop.permute.xlu0 %1712
    %1714 = vrot.lane.b32.xlu0 %v1703, 125
    %v1715 = vpop.permute.xlu0 %1714
    %v1720 = vadd.f32 %v1616, %v1709
    %v1721 = vadd.f32 %v1617, %v1711
    %v1722 = vadd.f32 %v1618, %v1713
    %v1723 = vadd.f32 %v1619, %v1715
    %s1724 = sld [smem:[#allocation2 + $0x44]]
    %v1725 = vstv %s1724
    %v1726 = vmul.f32 %v1725, %v1420
    %v1727 = vmul.f32 %v1725, %v1421
    %v1728 = vmul.f32 %v1725, %v1422
    %v1729 = vmul.f32 %v1725, %v1423
    %1734 = vrot.lane.b32.xlu0 %v1726, 125
    %v1735 = vpop.permute.xlu0 %1734
    %1736 = vrot.lane.b32.xlu0 %v1727, 125
    %v1737 = vpop.permute.xlu0 %1736
    %1738 = vrot.lane.b32.xlu0 %v1728, 125
    %v1739 = vpop.permute.xlu0 %1738
    %1740 = vrot.lane.b32.xlu0 %v1729, 125
    %v1741 = vpop.permute.xlu0 %1740
    %v1746 = vadd.f32 %v1642, %v1735
    %v1747 = vadd.f32 %v1643, %v1737
    %v1748 = vadd.f32 %v1644, %v1739
    %v1749 = vadd.f32 %v1645, %v1741
    %s1750 = sld [smem:[#allocation2 + $0x5d]]
    %v1751 = vstv %s1750
    %v1752 = vmul.f32 %v1751, %v1420
    %v1753 = vmul.f32 %v1751, %v1421
    %v1754 = vmul.f32 %v1751, %v1422
    %v1755 = vmul.f32 %v1751, %v1423
    %1760 = vrot.lane.b32.xlu0 %v1752, 125
    %v1761 = vpop.permute.xlu0 %1760
    %1762 = vrot.lane.b32.xlu0 %v1753, 125
    %v1763 = vpop.permute.xlu0 %1762
    %1764 = vrot.lane.b32.xlu0 %v1754, 125
    %v1765 = vpop.permute.xlu0 %1764
    %1766 = vrot.lane.b32.xlu0 %v1755, 125
    %v1767 = vpop.permute.xlu0 %1766
    %v1772 = vadd.f32 %v1668, %v1761
    %v1773 = vadd.f32 %v1669, %v1763
    %v1774 = vadd.f32 %v1670, %v1765
    %v1775 = vadd.f32 %v1671, %v1767
    %s1776 = sld [smem:[#allocation2 + $0x13]]
    %v1777 = vstv %s1776
    %v1778 = vmul.f32 %v1777, %v1420
    %v1779 = vmul.f32 %v1777, %v1421
    %v1780 = vmul.f32 %v1777, %v1422
    %v1781 = vmul.f32 %v1777, %v1423
    %1786 = vrot.lane.b32.xlu0 %v1778, 124
    %v1787 = vpop.permute.xlu0 %1786
    %1788 = vrot.lane.b32.xlu0 %v1779, 124
    %v1789 = vpop.permute.xlu0 %1788
    %1790 = vrot.lane.b32.xlu0 %v1780, 124
    %v1791 = vpop.permute.xlu0 %1790
    %1792 = vrot.lane.b32.xlu0 %v1781, 124
    %v1793 = vpop.permute.xlu0 %1792
    %v1798 = vadd.f32 %v1694, %v1787
    %v1799 = vadd.f32 %v1695, %v1789
    %v1800 = vadd.f32 %v1696, %v1791
    %v1801 = vadd.f32 %v1697, %v1793
    %s1802 = sld [smem:[#allocation2 + $0x2c]]
    %v1803 = vstv %s1802
    %v1804 = vmul.f32 %v1803, %v1420
    %v1805 = vmul.f32 %v1803, %v1421
    %v1806 = vmul.f32 %v1803, %v1422
    %v1807 = vmul.f32 %v1803, %v1423
    %1812 = vrot.lane.b32.xlu0 %v1804, 124
    %v1813 = vpop.permute.xlu0 %1812
    %1814 = vrot.lane.b32.xlu0 %v1805, 124
    %v1815 = vpop.permute.xlu0 %1814
    %1816 = vrot.lane.b32.xlu0 %v1806, 124
    %v1817 = vpop.permute.xlu0 %1816
    %1818 = vrot.lane.b32.xlu0 %v1807, 124
    %v1819 = vpop.permute.xlu0 %1818
    %v1824 = vadd.f32 %v1720, %v1813
    %v1825 = vadd.f32 %v1721, %v1815
    %v1826 = vadd.f32 %v1722, %v1817
    %v1827 = vadd.f32 %v1723, %v1819
    %s1828 = sld [smem:[#allocation2 + $0x45]]
    %v1829 = vstv %s1828
    %v1830 = vmul.f32 %v1829, %v1420
    %v1831 = vmul.f32 %v1829, %v1421
    %v1832 = vmul.f32 %v1829, %v1422
    %v1833 = vmul.f32 %v1829, %v1423
    %1838 = vrot.lane.b32.xlu0 %v1830, 124
    %v1839 = vpop.permute.xlu0 %1838
    %1840 = vrot.lane.b32.xlu0 %v1831, 124
    %v1841 = vpop.permute.xlu0 %1840
    %1842 = vrot.lane.b32.xlu0 %v1832, 124
    %v1843 = vpop.permute.xlu0 %1842
    %1844 = vrot.lane.b32.xlu0 %v1833, 124
    %v1845 = vpop.permute.xlu0 %1844
    %v1850 = vadd.f32 %v1746, %v1839
    %v1851 = vadd.f32 %v1747, %v1841
    %v1852 = vadd.f32 %v1748, %v1843
    %v1853 = vadd.f32 %v1749, %v1845
    %s1854 = sld [smem:[#allocation2 + $0x5e]]
    %v1855 = vstv %s1854
    %v1856 = vmul.f32 %v1855, %v1420
    %v1857 = vmul.f32 %v1855, %v1421
    %v1858 = vmul.f32 %v1855, %v1422
    %v1859 = vmul.f32 %v1855, %v1423
    %1864 = vrot.lane.b32.xlu0 %v1856, 124
    %v1865 = vpop.permute.xlu0 %1864
    %1866 = vrot.lane.b32.xlu0 %v1857, 124
    %v1867 = vpop.permute.xlu0 %1866
    %1868 = vrot.lane.b32.xlu0 %v1858, 124
    %v1869 = vpop.permute.xlu0 %1868
    %1870 = vrot.lane.b32.xlu0 %v1859, 124
    %v1871 = vpop.permute.xlu0 %1870
    %v1876 = vadd.f32 %v1772, %v1865
    %v1877 = vadd.f32 %v1773, %v1867
    %v1878 = vadd.f32 %v1774, %v1869
    %v1879 = vadd.f32 %v1775, %v1871
    %v1880 = vld [vmem:[%s0 + $0x4] sm:$0xff]
    %v1881 = vld [vmem:[%s0 + $0xc] sm:$0xff]
    %v1882 = vld [vmem:[%s0 + $0x1c] sm:$0xff]
    %v1883 = vld [vmem:[%s0 + $0x24] sm:$0xff]
    %s1884 = sld [smem:[#allocation2 + $0x14]]
    %v1885 = vstv %s1884
    %v1886 = vmul.f32 %v1885, %v1880
    %v1887 = vmul.f32 %v1885, %v1881
    %v1888 = vmul.f32 %v1885, %v1882
    %v1889 = vmul.f32 %v1885, %v1883
    %v1890 = vadd.f32 %v1798, %v1886
    %v1891 = vadd.f32 %v1799, %v1887
    %v1892 = vadd.f32 %v1800, %v1888
    %v1893 = vadd.f32 %v1801, %v1889
    %s1894 = sld [smem:[#allocation2 + $0x2d]]
    %v1895 = vstv %s1894
    %v1896 = vmul.f32 %v1895, %v1880
    %v1897 = vmul.f32 %v1895, %v1881
    %v1898 = vmul.f32 %v1895, %v1882
    %v1899 = vmul.f32 %v1895, %v1883
    %v1900 = vadd.f32 %v1824, %v1896
    %v1901 = vadd.f32 %v1825, %v1897
    %v1902 = vadd.f32 %v1826, %v1898
    %v1903 = vadd.f32 %v1827, %v1899
    %s1904 = sld [smem:[#allocation2 + $0x46]]
    %v1905 = vstv %s1904
    %v1906 = vmul.f32 %v1905, %v1880
    %v1907 = vmul.f32 %v1905, %v1881
    %v1908 = vmul.f32 %v1905, %v1882
    %v1909 = vmul.f32 %v1905, %v1883
    %v1910 = vadd.f32 %v1850, %v1906
    %v1911 = vadd.f32 %v1851, %v1907
    %v1912 = vadd.f32 %v1852, %v1908
    %v1913 = vadd.f32 %v1853, %v1909
    %s1914 = sld [smem:[#allocation2 + $0x5f]]
    %v1915 = vstv %s1914
    %v1916 = vmul.f32 %v1915, %v1880
    %v1917 = vmul.f32 %v1915, %v1881
    %v1918 = vmul.f32 %v1915, %v1882
    %v1919 = vmul.f32 %v1915, %v1883
    %v1920 = vadd.f32 %v1876, %v1916
    %v1921 = vadd.f32 %v1877, %v1917
    %v1922 = vadd.f32 %v1878, %v1918
    %v1923 = vadd.f32 %v1879, %v1919
    %s1924 = sld [smem:[#allocation2 + $0x15]]
    %v1925 = vstv %s1924
    %v1926 = vmul.f32 %v1925, %v1880
    %v1927 = vmul.f32 %v1925, %v1881
    %v1928 = vmul.f32 %v1925, %v1882
    %v1929 = vmul.f32 %v1925, %v1883
    %1934 = vrot.lane.b32.xlu0 %v1926, 127
    %v1935 = vpop.permute.xlu0 %1934
    %1936 = vrot.lane.b32.xlu0 %v1927, 127
    %v1937 = vpop.permute.xlu0 %1936
    %1938 = vrot.lane.b32.xlu0 %v1928, 127
    %v1939 = vpop.permute.xlu0 %1938
    %1940 = vrot.lane.b32.xlu0 %v1929, 127
    %v1941 = vpop.permute.xlu0 %1940
    %v1946 = vadd.f32 %v1890, %v1935
    %v1947 = vadd.f32 %v1891, %v1937
    %v1948 = vadd.f32 %v1892, %v1939
    %v1949 = vadd.f32 %v1893, %v1941
    %s1950 = sld [smem:[#allocation2 + $0x2e]]
    %v1951 = vstv %s1950
    %v1952 = vmul.f32 %v1951, %v1880
    %v1953 = vmul.f32 %v1951, %v1881
    %v1954 = vmul.f32 %v1951, %v1882
    %v1955 = vmul.f32 %v1951, %v1883
    %1960 = vrot.lane.b32.xlu0 %v1952, 127
    %v1961 = vpop.permute.xlu0 %1960
    %1962 = vrot.lane.b32.xlu0 %v1953, 127
    %v1963 = vpop.permute.xlu0 %1962
    %1964 = vrot.lane.b32.xlu0 %v1954, 127
    %v1965 = vpop.permute.xlu0 %1964
    %1966 = vrot.lane.b32.xlu0 %v1955, 127
    %v1967 = vpop.permute.xlu0 %1966
    %v1972 = vadd.f32 %v1900, %v1961
    %v1973 = vadd.f32 %v1901, %v1963
    %v1974 = vadd.f32 %v1902, %v1965
    %v1975 = vadd.f32 %v1903, %v1967
    %s1976 = sld [smem:[#allocation2 + $0x47]]
    %v1977 = vstv %s1976
    %v1978 = vmul.f32 %v1977, %v1880
    %v1979 = vmul.f32 %v1977, %v1881
    %v1980 = vmul.f32 %v1977, %v1882
    %v1981 = vmul.f32 %v1977, %v1883
    %1986 = vrot.lane.b32.xlu0 %v1978, 127
    %v1987 = vpop.permute.xlu0 %1986
    %1988 = vrot.lane.b32.xlu0 %v1979, 127
    %v1989 = vpop.permute.xlu0 %1988
    %1990 = vrot.lane.b32.xlu0 %v1980, 127
    %v1991 = vpop.permute.xlu0 %1990
    %1992 = vrot.lane.b32.xlu0 %v1981, 127
    %v1993 = vpop.permute.xlu0 %1992
    %v1998 = vadd.f32 %v1910, %v1987
    %v1999 = vadd.f32 %v1911, %v1989
    %v2000 = vadd.f32 %v1912, %v1991
    %v2001 = vadd.f32 %v1913, %v1993
    %s2002 = sld [smem:[#allocation2 + $0x60]]
    %v2003 = vstv %s2002
    %v2004 = vmul.f32 %v2003, %v1880
    %v2005 = vmul.f32 %v2003, %v1881
    %v2006 = vmul.f32 %v2003, %v1882
    %v2007 = vmul.f32 %v2003, %v1883
    %2012 = vrot.lane.b32.xlu0 %v2004, 127
    %v2013 = vpop.permute.xlu0 %2012
    %2014 = vrot.lane.b32.xlu0 %v2005, 127
    %v2015 = vpop.permute.xlu0 %2014
    %2016 = vrot.lane.b32.xlu0 %v2006, 127
    %v2017 = vpop.permute.xlu0 %2016
    %2018 = vrot.lane.b32.xlu0 %v2007, 127
    %v2019 = vpop.permute.xlu0 %2018
    %v2024 = vadd.f32 %v1920, %v2013
    %v2025 = vadd.f32 %v1921, %v2015
    %v2026 = vadd.f32 %v1922, %v2017
    %v2027 = vadd.f32 %v1923, %v2019
    %s2028 = sld [smem:[#allocation2 + $0x16]]
    %v2029 = vstv %s2028
    %v2030 = vmul.f32 %v2029, %v1880
    %v2031 = vmul.f32 %v2029, %v1881
    %v2032 = vmul.f32 %v2029, %v1882
    %v2033 = vmul.f32 %v2029, %v1883
    %2038 = vrot.lane.b32.xlu0 %v2030, 126
    %v2039 = vpop.permute.xlu0 %2038
    %2040 = vrot.lane.b32.xlu0 %v2031, 126
    %v2041 = vpop.permute.xlu0 %2040
    %2042 = vrot.lane.b32.xlu0 %v2032, 126
    %v2043 = vpop.permute.xlu0 %2042
    %2044 = vrot.lane.b32.xlu0 %v2033, 126
    %v2045 = vpop.permute.xlu0 %2044
    %v2050 = vadd.f32 %v1946, %v2039
    %v2051 = vadd.f32 %v1947, %v2041
    %v2052 = vadd.f32 %v1948, %v2043
    %v2053 = vadd.f32 %v1949, %v2045
    %s2054 = sld [smem:[#allocation2 + $0x2f]]
    %v2055 = vstv %s2054
    %v2056 = vmul.f32 %v2055, %v1880
    %v2057 = vmul.f32 %v2055, %v1881
    %v2058 = vmul.f32 %v2055, %v1882
    %v2059 = vmul.f32 %v2055, %v1883
    %2064 = vrot.lane.b32.xlu0 %v2056, 126
    %v2065 = vpop.permute.xlu0 %2064
    %2066 = vrot.lane.b32.xlu0 %v2057, 126
    %v2067 = vpop.permute.xlu0 %2066
    %2068 = vrot.lane.b32.xlu0 %v2058, 126
    %v2069 = vpop.permute.xlu0 %2068
    %2070 = vrot.lane.b32.xlu0 %v2059, 126
    %v2071 = vpop.permute.xlu0 %2070
    %v2076 = vadd.f32 %v1972, %v2065
    %v2077 = vadd.f32 %v1973, %v2067
    %v2078 = vadd.f32 %v1974, %v2069
    %v2079 = vadd.f32 %v1975, %v2071
    %s2080 = sld [smem:[#allocation2 + $0x48]]
    %v2081 = vstv %s2080
    %v2082 = vmul.f32 %v2081, %v1880
    %v2083 = vmul.f32 %v2081, %v1881
    %v2084 = vmul.f32 %v2081, %v1882
    %v2085 = vmul.f32 %v2081, %v1883
    %2090 = vrot.lane.b32.xlu0 %v2082, 126
    %v2091 = vpop.permute.xlu0 %2090
    %2092 = vrot.lane.b32.xlu0 %v2083, 126
    %v2093 = vpop.permute.xlu0 %2092
    %2094 = vrot.lane.b32.xlu0 %v2084, 126
    %v2095 = vpop.permute.xlu0 %2094
    %2096 = vrot.lane.b32.xlu0 %v2085, 126
    %v2097 = vpop.permute.xlu0 %2096
    %v2102 = vadd.f32 %v1998, %v2091
    %v2103 = vadd.f32 %v1999, %v2093
    %v2104 = vadd.f32 %v2000, %v2095
    %v2105 = vadd.f32 %v2001, %v2097
    %s2106 = sld [smem:[#allocation2 + $0x61]]
    %v2107 = vstv %s2106
    %v2108 = vmul.f32 %v2107, %v1880
    %v2109 = vmul.f32 %v2107, %v1881
    %v2110 = vmul.f32 %v2107, %v1882
    %v2111 = vmul.f32 %v2107, %v1883
    %2116 = vrot.lane.b32.xlu0 %v2108, 126
    %v2117 = vpop.permute.xlu0 %2116
    %2118 = vrot.lane.b32.xlu0 %v2109, 126
    %v2119 = vpop.permute.xlu0 %2118
    %2120 = vrot.lane.b32.xlu0 %v2110, 126
    %v2121 = vpop.permute.xlu0 %2120
    %2122 = vrot.lane.b32.xlu0 %v2111, 126
    %v2123 = vpop.permute.xlu0 %2122
    %v2128 = vadd.f32 %v2024, %v2117
    %v2129 = vadd.f32 %v2025, %v2119
    %v2130 = vadd.f32 %v2026, %v2121
    %v2131 = vadd.f32 %v2027, %v2123
    %s2132 = sld [smem:[#allocation2 + $0x17]]
    %v2133 = vstv %s2132
    %v2134 = vmul.f32 %v2133, %v1880
    %v2135 = vmul.f32 %v2133, %v1881
    %v2136 = vmul.f32 %v2133, %v1882
    %v2137 = vmul.f32 %v2133, %v1883
    %2142 = vrot.lane.b32.xlu0 %v2134, 125
    %v2143 = vpop.permute.xlu0 %2142
    %2144 = vrot.lane.b32.xlu0 %v2135, 125
    %v2145 = vpop.permute.xlu0 %2144
    %2146 = vrot.lane.b32.xlu0 %v2136, 125
    %v2147 = vpop.permute.xlu0 %2146
    %2148 = vrot.lane.b32.xlu0 %v2137, 125
    %v2149 = vpop.permute.xlu0 %2148
    %v2154 = vadd.f32 %v2050, %v2143
    %v2155 = vadd.f32 %v2051, %v2145
    %v2156 = vadd.f32 %v2052, %v2147
    %v2157 = vadd.f32 %v2053, %v2149
    %s2158 = sld [smem:[#allocation2 + $0x30]]
    %v2159 = vstv %s2158
    %v2160 = vmul.f32 %v2159, %v1880
    %v2161 = vmul.f32 %v2159, %v1881
    %v2162 = vmul.f32 %v2159, %v1882
    %v2163 = vmul.f32 %v2159, %v1883
    %2168 = vrot.lane.b32.xlu0 %v2160, 125
    %v2169 = vpop.permute.xlu0 %2168
    %2170 = vrot.lane.b32.xlu0 %v2161, 125
    %v2171 = vpop.permute.xlu0 %2170
    %2172 = vrot.lane.b32.xlu0 %v2162, 125
    %v2173 = vpop.permute.xlu0 %2172
    %2174 = vrot.lane.b32.xlu0 %v2163, 125
    %v2175 = vpop.permute.xlu0 %2174
    %v2180 = vadd.f32 %v2076, %v2169
    %v2181 = vadd.f32 %v2077, %v2171
    %v2182 = vadd.f32 %v2078, %v2173
    %v2183 = vadd.f32 %v2079, %v2175
    %s2184 = sld [smem:[#allocation2 + $0x49]]
    %v2185 = vstv %s2184
    %v2186 = vmul.f32 %v2185, %v1880
    %v2187 = vmul.f32 %v2185, %v1881
    %v2188 = vmul.f32 %v2185, %v1882
    %v2189 = vmul.f32 %v2185, %v1883
    %2194 = vrot.lane.b32.xlu0 %v2186, 125
    %v2195 = vpop.permute.xlu0 %2194
    %2196 = vrot.lane.b32.xlu0 %v2187, 125
    %v2197 = vpop.permute.xlu0 %2196
    %2198 = vrot.lane.b32.xlu0 %v2188, 125
    %v2199 = vpop.permute.xlu0 %2198
    %2200 = vrot.lane.b32.xlu0 %v2189, 125
    %v2201 = vpop.permute.xlu0 %2200
    %v2206 = vadd.f32 %v2102, %v2195
    %v2207 = vadd.f32 %v2103, %v2197
    %v2208 = vadd.f32 %v2104, %v2199
    %v2209 = vadd.f32 %v2105, %v2201
    %s2210 = sld [smem:[#allocation2 + $0x62]]
    %v2211 = vstv %s2210
    %v2212 = vmul.f32 %v2211, %v1880
    %v2213 = vmul.f32 %v2211, %v1881
    %v2214 = vmul.f32 %v2211, %v1882
    %v2215 = vmul.f32 %v2211, %v1883
    %2220 = vrot.lane.b32.xlu0 %v2212, 125
    %v2221 = vpop.permute.xlu0 %2220
    %2222 = vrot.lane.b32.xlu0 %v2213, 125
    %v2223 = vpop.permute.xlu0 %2222
    %2224 = vrot.lane.b32.xlu0 %v2214, 125
    %v2225 = vpop.permute.xlu0 %2224
    %2226 = vrot.lane.b32.xlu0 %v2215, 125
    %v2227 = vpop.permute.xlu0 %2226
    %v2232 = vadd.f32 %v2128, %v2221
    %v2233 = vadd.f32 %v2129, %v2223
    %v2234 = vadd.f32 %v2130, %v2225
    %v2235 = vadd.f32 %v2131, %v2227
    %s2236 = sld [smem:[#allocation2 + $0x18]]
    %v2237 = vstv %s2236
    %v2238 = vmul.f32 %v2237, %v1880
    %v2239 = vmul.f32 %v2237, %v1881
    %v2240 = vmul.f32 %v2237, %v1882
    %v2241 = vmul.f32 %v2237, %v1883
    %2246 = vrot.lane.b32.xlu0 %v2238, 124
    %v2247 = vpop.permute.xlu0 %2246
    %2248 = vrot.lane.b32.xlu0 %v2239, 124
    %v2249 = vpop.permute.xlu0 %2248
    %2250 = vrot.lane.b32.xlu0 %v2240, 124
    %v2251 = vpop.permute.xlu0 %2250
    %2252 = vrot.lane.b32.xlu0 %v2241, 124
    %v2253 = vpop.permute.xlu0 %2252
    %v2258 = vadd.f32 %v2154, %v2247
    %v2259 = vadd.f32 %v2155, %v2249
    %v2260 = vadd.f32 %v2156, %v2251
    %v2261 = vadd.f32 %v2157, %v2253
    %s2262 = sld [smem:[#allocation2 + $0x31]]
    %v2263 = vstv %s2262
    %v2264 = vmul.f32 %v2263, %v1880
    %v2265 = vmul.f32 %v2263, %v1881
    %v2266 = vmul.f32 %v2263, %v1882
    %v2267 = vmul.f32 %v2263, %v1883
    %2272 = vrot.lane.b32.xlu0 %v2264, 124
    %v2273 = vpop.permute.xlu0 %2272
    %2274 = vrot.lane.b32.xlu0 %v2265, 124
    %v2275 = vpop.permute.xlu0 %2274
    %2276 = vrot.lane.b32.xlu0 %v2266, 124
    %v2277 = vpop.permute.xlu0 %2276
    %2278 = vrot.lane.b32.xlu0 %v2267, 124
    %v2279 = vpop.permute.xlu0 %2278
    %v2284 = vadd.f32 %v2180, %v2273
    %v2285 = vadd.f32 %v2181, %v2275
    %v2286 = vadd.f32 %v2182, %v2277
    %v2287 = vadd.f32 %v2183, %v2279
    %s2288 = sld [smem:[#allocation2 + $0x4a]]
    %v2289 = vstv %s2288
    %v2290 = vmul.f32 %v2289, %v1880
    %v2291 = vmul.f32 %v2289, %v1881
    %v2292 = vmul.f32 %v2289, %v1882
    %v2293 = vmul.f32 %v2289, %v1883
    %2298 = vrot.lane.b32.xlu0 %v2290, 124
    %v2299 = vpop.permute.xlu0 %2298
    %2300 = vrot.lane.b32.xlu0 %v2291, 124
    %v2301 = vpop.permute.xlu0 %2300
    %2302 = vrot.lane.b32.xlu0 %v2292, 124
    %v2303 = vpop.permute.xlu0 %2302
    %2304 = vrot.lane.b32.xlu0 %v2293, 124
    %v2305 = vpop.permute.xlu0 %2304
    %v2310 = vadd.f32 %v2206, %v2299
    %v2311 = vadd.f32 %v2207, %v2301
    %v2312 = vadd.f32 %v2208, %v2303
    %v2313 = vadd.f32 %v2209, %v2305
    %s2314 = sld [smem:[#allocation2 + $0x63]]
    %v2315 = vstv %s2314
    %v2316 = vmul.f32 %v2315, %v1880
    %v2317 = vmul.f32 %v2315, %v1881
    %v2318 = vmul.f32 %v2315, %v1882
    %v2319 = vmul.f32 %v2315, %v1883
    %2324 = vrot.lane.b32.xlu0 %v2316, 124
    %v2325 = vpop.permute.xlu0 %2324
    %2326 = vrot.lane.b32.xlu0 %v2317, 124
    %v2327 = vpop.permute.xlu0 %2326
    %2328 = vrot.lane.b32.xlu0 %v2318, 124
    %v2329 = vpop.permute.xlu0 %2328
    %2330 = vrot.lane.b32.xlu0 %v2319, 124
    %v2331 = vpop.permute.xlu0 %2330
    %v2336 = vadd.f32 %v2232, %v2325
    %v2337 = vadd.f32 %v2233, %v2327
    %v2338 = vadd.f32 %v2234, %v2329
    %v2339 = vadd.f32 %v2235, %v2331
    %s2340 = sld [smem:[#allocation5]]
    %v2341 = vstv %s2340
    %v2342 = vadd.f32 %v2258, %v2341
    %v2343 = vadd.f32 %v2259, %v2341
    %v2344 = vadd.f32 %v2260, %v2341
    %v2345 = vadd.f32 %v2261, %v2341
    %vm2346 = vcmask 130048
    %2347 = vst.msk [vmem:[#allocation7] sm:$0xff] %vm2346, %v2342
    %2348 = vst.msk [vmem:[#allocation7 + $0x8] sm:$0xff] %vm2346, %v2343
    %2349 = vst.msk [vmem:[#allocation7 + $0x40] sm:$0xff] %vm2346, %v2344
    %2350 = vst.msk [vmem:[#allocation7 + $0x48] sm:$0xff] %vm2346, %v2345
    %s2351 = sld [smem:[#allocation5 + $0x1]]
    %v2352 = vstv %s2351
    %v2353 = vadd.f32 %v2284, %v2352
    %v2354 = vadd.f32 %v2285, %v2352
    %v2355 = vadd.f32 %v2286, %v2352
    %v2356 = vadd.f32 %v2287, %v2352
    %s2357 = scalar_lea.vmem [#allocation7], 16
    %2358 = vst.msk [vmem:[%s2357] sm:$0xff] %vm2346, %v2353
    %2359 = vst.msk [vmem:[%s2357 + $0x8] sm:$0xff] %vm2346, %v2354
    %2360 = vst.msk [vmem:[%s2357 + $0x40] sm:$0xff] %vm2346, %v2355
    %2361 = vst.msk [vmem:[%s2357 + $0x48] sm:$0xff] %vm2346, %v2356
    %s2362 = sld [smem:[#allocation5 + $0x2]]
    %v2363 = vstv %s2362
    %v2364 = vadd.f32 %v2310, %v2363
    %v2365 = vadd.f32 %v2311, %v2363
    %v2366 = vadd.f32 %v2312, %v2363
    %v2367 = vadd.f32 %v2313, %v2363
    %s2368 = scalar_lea.vmem [#allocation7], 32
    %2369 = vst.msk [vmem:[%s2368] sm:$0xff] %vm2346, %v2364
    %2370 = vst.msk [vmem:[%s2368 + $0x8] sm:$0xff] %vm2346, %v2365
    %2371 = vst.msk [vmem:[%s2368 + $0x40] sm:$0xff] %vm2346, %v2366
    %2372 = vst.msk [vmem:[%s2368 + $0x48] sm:$0xff] %vm2346, %v2367
    %s2373 = sld [smem:[#allocation5 + $0x3]]
    %v2374 = vstv %s2373
    %v2375 = vadd.f32 %v2336, %v2374
    %v2376 = vadd.f32 %v2337, %v2374
    %v2377 = vadd.f32 %v2338, %v2374
    %v2378 = vadd.f32 %v2339, %v2374
    %s2379 = scalar_lea.vmem [#allocation7], 48
    %2380 = vst.msk [vmem:[%s2379] sm:$0xff] %vm2346, %v2375
    %2381 = vst.msk [vmem:[%s2379 + $0x8] sm:$0xff] %vm2346, %v2376
    %2382 = vst.msk [vmem:[%s2379 + $0x40] sm:$0xff] %vm2346, %v2377
    %2383 = vst.msk [vmem:[%s2379 + $0x48] sm:$0xff] %vm2346, %v2378
    // Predicated region
    $region22: #{prelayer_forward.1} parent=1 // pred_check
      _
    $region23: #{prelayer_forward.1} parent=1 // pred_check_branch
      %2385 = sbr.rel (0) target = $region25
    $region24: #{prelayer_forward.1} parent=1 // pred_region
      %s2387 = ssub.s32 2048, 2048
      %2388 = vsyncadd [#allocation3], %s2387
      %s2389 = sshll.u32 [#allocation7], 4
      %s2390 = int_to_ptr.vmem [resolvable:$true] %s2389
      %2395 = dma.vmem_to_hbm [thread:$0]  %s2390, 2048, %s3, [#allocation3], 128, 128, 8
    $region25: #{prelayer_forward.1} parent=1 // pred_fallthru
      _
    // Predicated region
    $region26: #{prelayer_forward.1} parent=1 // pred_check
      _
    $region27: #{prelayer_forward.1} parent=1 // pred_check_branch
      %2397 = sbr.rel (0) target = $region29
    $region28: #{prelayer_forward.1} parent=1 // pred_region
      %2398 = dma.done [#allocation3], 2048
    $region29: #{prelayer_forward.1} parent=1 // pred_fallthru
      _
    %2399 = vsyncpa [#allocation3], 1
    %2400 = vsyncpa [#allocation4], 1
    %2401 = vsyncpa [#allocation6], 1

</llo_original>
